<compile_context>
chip_gen: v7x
topology: tpu7x:2x2x1
jax: 0.10.0
libtpu: 0.0.40
codegen_flags: <defaults>
</compile_context>

<pallas_src>
import jax
import jax.numpy as jnp
from jax.experimental import pallas as pl
from jax.experimental.pallas import tpu as pltpu

LANE = 128


def _round_up(x, m):
    return ((x + m - 1) // m) * m


def _vmem_limit_bytes():
    # Per-generation VMEM budget with headroom for compiler-internal scratch
    # (v7x: 64 MiB/TC, v5e/v6e: 128 MiB).
    cap = 128 * 1024 * 1024
    try:
        cap = int(getattr(pltpu.get_tpu_info(), "vmem_capacity_bytes", cap))
    except Exception:
        pass
    return min((cap * 3) // 4, 100 * 1024 * 1024)


# ----------------------------------------------------------------------------
# Fused kernel: 2-layer mean-aggregator GraphSAGE + per-edge rating epilogue.
# All operands are full VMEM-resident blocks (single grid step).
# ----------------------------------------------------------------------------
def fused_sage_rating_kernel(x_ref, a_ref, w1s_ref, w1n_ref, b1_ref,
                             w2s_ref, w2n_ref, b2_ref, ssrc_ref, sdst_ref,
                             refined_ref, ratings_ref):
    x = x_ref[...]                                    # (Np, Dp) bf16
    a = a_ref[...]                                    # (Np, Np) bf16

    # Layer 1: h = relu(x @ W1_self + (A @ x) @ W1_neigh + b1)
    agg1 = jnp.dot(a, x, preferred_element_type=jnp.float32)
    h = (jnp.dot(x, w1s_ref[...], preferred_element_type=jnp.float32)
         + jnp.dot(agg1.astype(jnp.bfloat16), w1n_ref[...],
                   preferred_element_type=jnp.float32)
         + b1_ref[...])
    h = jnp.maximum(h, 0.0).astype(jnp.bfloat16)      # (Np, Hp)

    # Layer 2: out = h @ W2_self + (A @ h) @ W2_neigh + b2
    agg2 = jnp.dot(a, h, preferred_element_type=jnp.float32)
    out = (jnp.dot(h, w2s_ref[...], preferred_element_type=jnp.float32)
           + jnp.dot(agg2.astype(jnp.bfloat16), w2n_ref[...],
                     preferred_element_type=jnp.float32)
           + b2_ref[...])                             # (Np, Dp) f32
    refined_ref[...] = out

    # Fused rating epilogue: gather edge endpoint rows on the MXU via one-hot
    # selector matmuls (no HBM round trip of gathered (E, D) arrays).
    out_bf = out.astype(jnp.bfloat16)
    src_rows = jnp.dot(ssrc_ref[...], out_bf, preferred_element_type=jnp.float32)
    dst_rows = jnp.dot(sdst_ref[...], out_bf, preferred_element_type=jnp.float32)
    ratings_ref[...] = jnp.sum(src_rows * dst_rows, axis=1, keepdims=True)


# ----------------------------------------------------------------------------
# Full model forward (glue in plain JAX: concat, adjacency / selector build,
# padding, weight layout).
# ----------------------------------------------------------------------------
def movie_user_forward(edge_index, edge_attr, params):
    del edge_attr  # unused by the reference forward (kept for signature parity)

    # all_embeddings = cat([movie_embeddings.weight, user_embeddings.weight])
    all_emb = jnp.concatenate([params["movie_emb"], params["user_emb"]], axis=0)
    n, d = all_emb.shape
    h_dim = params["b1"].shape[0]

    d_p = _round_up(d, LANE)
    h_p = _round_up(h_dim, LANE)
    n_p = _round_up(n, LANE)   # lane-dense contraction dim for A@X / selectors

    src = edge_index[0].astype(jnp.int32)
    dst = edge_index[1].astype(jnp.int32)
    e = src.shape[0]
    e_p = _round_up(e, LANE)

    # Padded node features. (Padded node rows pick up the biases through the
    # layers, but A's columns and the edge selectors never reference padded
    # nodes, so real nodes are never contaminated; padded rows are sliced off.)
    x_pad = jnp.zeros((n_p, d_p), jnp.float32).at[:n, :d].set(all_emb)

    # Mean-normalized undirected adjacency (dense, bf16 MXU operand).
    adj = jnp.zeros((n_p, n_p), jnp.float32)
    adj = adj.at[dst, src].set(1.0)
    adj = adj.at[src, dst].set(1.0)
    deg = jnp.maximum(jnp.sum(adj, axis=1, keepdims=True), 1.0)
    a_mean = (adj / deg).astype(jnp.bfloat16)
    # TODO(synk): at real graph scale, replace the dense O(N^2) adjacency matmul
    # with a sparse scalar-prefetch gather + segment-sum aggregation kernel,
    # K-tile the contraction ("arbitrary" grid axis + f32 VMEM accumulator),
    # and single-buffer grid-invariant operands.

    # Zero-padded weights / biases (bf16 for MXU, biases f32).
    w1s = jnp.zeros((d_p, h_p), jnp.float32).at[:d, :h_dim].set(params["w1_self"]).astype(jnp.bfloat16)
    w1n = jnp.zeros((d_p, h_p), jnp.float32).at[:d, :h_dim].set(params["w1_neigh"]).astype(jnp.bfloat16)
    b1 = jnp.zeros((1, h_p), jnp.float32).at[0, :h_dim].set(params["b1"])
    w2s = jnp.zeros((h_p, d_p), jnp.float32).at[:h_dim, :d].set(params["w2_self"]).astype(jnp.bfloat16)
    w2n = jnp.zeros((h_p, d_p), jnp.float32).at[:h_dim, :d].set(params["w2_neigh"]).astype(jnp.bfloat16)
    b2 = jnp.zeros((1, d_p), jnp.float32).at[0, :d].set(params["b2"])

    # One-hot edge-endpoint selectors (padded edges select nothing -> rating 0).
    s_src = jnp.zeros((e_p, n_p), jnp.float32).at[jnp.arange(e), src].set(1.0).astype(jnp.bfloat16)
    s_dst = jnp.zeros((e_p, n_p), jnp.float32).at[jnp.arange(e), dst].set(1.0).astype(jnp.bfloat16)
    # TODO(synk): at large E, gather endpoint rows with scalar-prefetched edge
    # indices (PrefetchScalarGridSpec + pl.ds row fetches) instead of dense
    # one-hot selector matmuls.

    refined_pad, ratings_pad = pl.pallas_call(
        fused_sage_rating_kernel,
        out_shape=(jax.ShapeDtypeStruct((n_p, d_p), jnp.float32),
                   jax.ShapeDtypeStruct((e_p, 1), jnp.float32)),
        grid_spec=pltpu.PrefetchScalarGridSpec(
            num_scalar_prefetch=0,
            grid=(1,),
            in_specs=[
                pl.BlockSpec((n_p, d_p), lambda i: (0, 0)),   # X
                pl.BlockSpec((n_p, n_p), lambda i: (0, 0)),   # A_mean
                pl.BlockSpec((d_p, h_p), lambda i: (0, 0)),   # W1_self
                pl.BlockSpec((d_p, h_p), lambda i: (0, 0)),   # W1_neigh
                pl.BlockSpec((1, h_p), lambda i: (0, 0)),     # b1
                pl.BlockSpec((h_p, d_p), lambda i: (0, 0)),   # W2_self
                pl.BlockSpec((h_p, d_p), lambda i: (0, 0)),   # W2_neigh
                pl.BlockSpec((1, d_p), lambda i: (0, 0)),     # b2
                pl.BlockSpec((e_p, n_p), lambda i: (0, 0)),   # S_src
                pl.BlockSpec((e_p, n_p), lambda i: (0, 0)),   # S_dst
            ],
            out_specs=[
                pl.BlockSpec((n_p, d_p), lambda i: (0, 0)),   # refined
                pl.BlockSpec((e_p, 1), lambda i: (0, 0)),     # ratings
            ],
        ),
        compiler_params=pltpu.CompilerParams(
            dimension_semantics=("arbitrary",),
            vmem_limit_bytes=_vmem_limit_bytes(),
        ),
    )(x_pad.astype(jnp.bfloat16), a_mean, w1s, w1n, b1, w2s, w2n, b2, s_src, s_dst)

    refined = refined_pad[:n, :d]
    ratings = ratings_pad[:e, 0]
    return ratings, refined


# ----------------------------------------------------------------------------
# Pure-JAX f32 reference (same math) for a relaxed-tolerance sanity check.
# ----------------------------------------------------------------------------
def movie_user_forward_ref(edge_index, params):
    all_emb = jnp.concatenate([params["movie_emb"], params["user_emb"]], axis=0)
    n = all_emb.shape[0]
    src, dst = edge_index[0], edge_index[1]
    adj = jnp.zeros((n, n), jnp.float32)
    adj = adj.at[dst, src].set(1.0)
    adj = adj.at[src, dst].set(1.0)
    deg = jnp.maximum(jnp.sum(adj, axis=1, keepdims=True), 1.0)
    a = adj / deg
    h = jnp.maximum(all_emb @ params["w1_self"] + (a @ all_emb) @ params["w1_neigh"]
                    + params["b1"][None, :], 0.0)
    out = h @ params["w2_self"] + (a @ h) @ params["w2_neigh"] + params["b2"][None, :]
    ratings = jnp.sum(out[src] * out[dst], axis=1)
    return ratings, out


# ----------------------------------------------------------------------------
# Deterministic parameter initialization (synthetic, no checkpoint load).
# ----------------------------------------------------------------------------
def init_params(num_movies, num_users, embedding_dim, hidden_dim, key):
    ks = jax.random.split(key, 6)
    scale_e = 0.1
    scale_w1 = 1.0 / jnp.sqrt(embedding_dim)
    scale_w2 = 1.0 / jnp.sqrt(hidden_dim)
    return {
        "movie_emb": scale_e * jax.random.normal(ks[0], (num_movies, embedding_dim), jnp.float32),
        "user_emb":  scale_e * jax.random.normal(ks[1], (num_users, embedding_dim), jnp.float32),
        "w1_self":  scale_w1 * jax.random.normal(ks[2], (embedding_dim, hidden_dim), jnp.float32),
        "w1_neigh": scale_w1 * jax.random.normal(ks[3], (embedding_dim, hidden_dim), jnp.float32),
        "b1": jnp.zeros((hidden_dim,), jnp.float32),
        "w2_self":  scale_w2 * jax.random.normal(ks[4], (hidden_dim, embedding_dim), jnp.float32),
        "w2_neigh": scale_w2 * jax.random.normal(ks[5], (hidden_dim, embedding_dim), jnp.float32),
        "b2": jnp.zeros((embedding_dim,), jnp.float32),
    }


if __name__ == "__main__":
    num_movies, num_users = 24, 24            # N = 48 nodes (padded to 128)
    embedding_dim, hidden_dim = 32, 48        # padded to 128 lanes in the wrapper
    num_edges = 40                            # padded to 128 lane rows

    key = jax.random.PRNGKey(0)
    k_params, k_edges, k_attr = jax.random.split(key, 3)

    params = init_params(num_movies, num_users, embedding_dim, hidden_dim, k_params)

    # Bipartite edges: movie node id in [0, num_movies),
    # user node id in [num_movies, num_movies + num_users).
    k_src, k_dst = jax.random.split(k_edges)
    edge_src = jax.random.randint(k_src, (num_edges,), 0, num_movies)
    edge_dst = jax.random.randint(k_dst, (num_edges,), num_movies, num_movies + num_users)
    edge_index = jnp.stack([edge_src, edge_dst], axis=0).astype(jnp.int32)   # (2, E)
    edge_attr = jax.random.normal(k_attr, (num_edges,), jnp.float32)         # unused

    ratings, refined = jax.jit(movie_user_forward)(edge_index, edge_attr, params)
    jax.block_until_ready((ratings, refined))

    assert ratings.shape == (num_edges,)
    assert refined.shape == (num_movies + num_users, embedding_dim)
    assert bool(jnp.all(jnp.isfinite(ratings))) and bool(jnp.all(jnp.isfinite(refined)))

    # Relaxed-tolerance check vs the f32 pure-JAX reference (bf16 MXU operands).
    ratings_ref, refined_ref = jax.jit(movie_user_forward_ref)(edge_index, params)
    assert float(jnp.max(jnp.abs(refined - refined_ref))) < 0.1
    assert float(jnp.max(jnp.abs(ratings - ratings_ref))) < 0.1

    print("KERNEL_OK")
</pallas_src>

<mosaic_0001>
module attributes {stable_mosaic.version = 11 : i64} {
  func.func @fused_sage_rating_kernel(%arg0: i32, %arg1: memref<128x128xbf16, #tpu.memory_space<vmem>>, %arg2: memref<128x128xbf16, #tpu.memory_space<vmem>>, %arg3: memref<128x128xbf16, #tpu.memory_space<vmem>>, %arg4: memref<128x128xbf16, #tpu.memory_space<vmem>>, %arg5: memref<1x128xf32, #tpu.memory_space<vmem>>, %arg6: memref<128x128xbf16, #tpu.memory_space<vmem>>, %arg7: memref<128x128xbf16, #tpu.memory_space<vmem>>, %arg8: memref<1x128xf32, #tpu.memory_space<vmem>>, %arg9: memref<128x128xbf16, #tpu.memory_space<vmem>>, %arg10: memref<128x128xbf16, #tpu.memory_space<vmem>>, %arg11: memref<128x128xf32, #tpu.memory_space<vmem>>, %arg12: memref<128x1xf32, #tpu.memory_space<vmem>>) attributes {dimension_semantics = [#tpu.dimension_semantics<arbitrary>], iteration_bounds = array<i64: 1>, scalar_prefetch = 0 : i64, scratch_operands = 0 : i64, tpu.core_type = #tpu.core_type<tc>, window_params = [{pipeline_mode = #tpu.pipeline_mode<synchronous>, transform_indices = @transform_0, window_bounds = array<i64: 128, 128>}, {pipeline_mode = #tpu.pipeline_mode<synchronous>, transform_indices = @transform_1, window_bounds = array<i64: 128, 128>}, {pipeline_mode = #tpu.pipeline_mode<synchronous>, transform_indices = @transform_2, window_bounds = array<i64: 128, 128>}, {pipeline_mode = #tpu.pipeline_mode<synchronous>, transform_indices = @transform_3, window_bounds = array<i64: 128, 128>}, {pipeline_mode = #tpu.pipeline_mode<synchronous>, transform_indices = @transform_4, window_bounds = array<i64: 1, 128>}, {pipeline_mode = #tpu.pipeline_mode<synchronous>, transform_indices = @transform_5, window_bounds = array<i64: 128, 128>}, {pipeline_mode = #tpu.pipeline_mode<synchronous>, transform_indices = @transform_6, window_bounds = array<i64: 128, 128>}, {pipeline_mode = #tpu.pipeline_mode<synchronous>, transform_indices = @transform_7, window_bounds = array<i64: 1, 128>}, {pipeline_mode = #tpu.pipeline_mode<synchronous>, transform_indices = @transform_8, window_bounds = array<i64: 128, 128>}, {pipeline_mode = #tpu.pipeline_mode<synchronous>, transform_indices = @transform_9, window_bounds = array<i64: 128, 128>}, {pipeline_mode = #tpu.pipeline_mode<synchronous>, transform_indices = @transform_10, window_bounds = array<i64: 128, 128>}, {pipeline_mode = #tpu.pipeline_mode<synchronous>, transform_indices = @transform_11, window_bounds = array<i64: 128, 1>}]} {
    %c0 = arith.constant 0 : index
    %c0_0 = arith.constant 0 : index
    %0 = vector.load %arg1[%c0, %c0_0] : memref<128x128xbf16, #tpu.memory_space<vmem>>, vector<128x128xbf16>
    %c0_1 = arith.constant 0 : index
    %c0_2 = arith.constant 0 : index
    %1 = vector.load %arg2[%c0_1, %c0_2] : memref<128x128xbf16, #tpu.memory_space<vmem>>, vector<128x128xbf16>
    %cst = arith.constant dense<0.000000e+00> : vector<128x128xf32>
    %2 = tpu.matmul %1, %0, %cst {dimension_numbers = #tpu.dot_dimension_numbers<[1], [0], [0], [1], [0, 0, 1, 1], [], []>} : vector<128x128xbf16>, vector<128x128xbf16>, vector<128x128xf32> -> vector<128x128xf32>
    %c0_3 = arith.constant 0 : index
    %c0_4 = arith.constant 0 : index
    %3 = vector.load %arg3[%c0_3, %c0_4] : memref<128x128xbf16, #tpu.memory_space<vmem>>, vector<128x128xbf16>
    %cst_5 = arith.constant dense<0.000000e+00> : vector<128x128xf32>
    %4 = tpu.matmul %0, %3, %cst_5 {dimension_numbers = #tpu.dot_dimension_numbers<[1], [0], [0], [1], [0, 0, 1, 1], [], []>} : vector<128x128xbf16>, vector<128x128xbf16>, vector<128x128xf32> -> vector<128x128xf32>
    %5 = arith.truncf %2 : vector<128x128xf32> to vector<128x128xbf16>
    %c0_6 = arith.constant 0 : index
    %c0_7 = arith.constant 0 : index
    %6 = vector.load %arg4[%c0_6, %c0_7] : memref<128x128xbf16, #tpu.memory_space<vmem>>, vector<128x128xbf16>
    %cst_8 = arith.constant dense<0.000000e+00> : vector<128x128xf32>
    %7 = tpu.matmul %5, %6, %cst_8 {dimension_numbers = #tpu.dot_dimension_numbers<[1], [0], [0], [1], [0, 0, 1, 1], [], []>} : vector<128x128xbf16>, vector<128x128xbf16>, vector<128x128xf32> -> vector<128x128xf32>
    %8 = arith.addf %4, %7 : vector<128x128xf32>
    %c0_9 = arith.constant 0 : index
    %c0_10 = arith.constant 0 : index
    %9 = vector.load %arg5[%c0_9, %c0_10] : memref<1x128xf32, #tpu.memory_space<vmem>>, vector<1x128xf32>
    %10 = vector.broadcast %9 : vector<1x128xf32> to vector<128x128xf32>
    %11 = arith.addf %8, %10 : vector<128x128xf32>
    %cst_11 = arith.constant 0.000000e+00 : f32
    %12 = vector.broadcast %cst_11 : f32 to vector<128x128xf32>
    %13 = arith.maximumf %11, %12 : vector<128x128xf32>
    %14 = arith.truncf %13 : vector<128x128xf32> to vector<128x128xbf16>
    %cst_12 = arith.constant dense<0.000000e+00> : vector<128x128xf32>
    %15 = tpu.matmul %1, %14, %cst_12 {dimension_numbers = #tpu.dot_dimension_numbers<[1], [0], [0], [1], [0, 0, 1, 1], [], []>} : vector<128x128xbf16>, vector<128x128xbf16>, vector<128x128xf32> -> vector<128x128xf32>
    %c0_13 = arith.constant 0 : index
    %c0_14 = arith.constant 0 : index
    %16 = vector.load %arg6[%c0_13, %c0_14] : memref<128x128xbf16, #tpu.memory_space<vmem>>, vector<128x128xbf16>
    %cst_15 = arith.constant dense<0.000000e+00> : vector<128x128xf32>
    %17 = tpu.matmul %14, %16, %cst_15 {dimension_numbers = #tpu.dot_dimension_numbers<[1], [0], [0], [1], [0, 0, 1, 1], [], []>} : vector<128x128xbf16>, vector<128x128xbf16>, vector<128x128xf32> -> vector<128x128xf32>
    %18 = arith.truncf %15 : vector<128x128xf32> to vector<128x128xbf16>
    %c0_16 = arith.constant 0 : index
    %c0_17 = arith.constant 0 : index
    %19 = vector.load %arg7[%c0_16, %c0_17] : memref<128x128xbf16, #tpu.memory_space<vmem>>, vector<128x128xbf16>
    %cst_18 = arith.constant dense<0.000000e+00> : vector<128x128xf32>
    %20 = tpu.matmul %18, %19, %cst_18 {dimension_numbers = #tpu.dot_dimension_numbers<[1], [0], [0], [1], [0, 0, 1, 1], [], []>} : vector<128x128xbf16>, vector<128x128xbf16>, vector<128x128xf32> -> vector<128x128xf32>
    %21 = arith.addf %17, %20 : vector<128x128xf32>
    %c0_19 = arith.constant 0 : index
    %c0_20 = arith.constant 0 : index
    %22 = vector.load %arg8[%c0_19, %c0_20] : memref<1x128xf32, #tpu.memory_space<vmem>>, vector<1x128xf32>
    %23 = vector.broadcast %22 : vector<1x128xf32> to vector<128x128xf32>
    %24 = arith.addf %21, %23 : vector<128x128xf32>
    %c0_21 = arith.constant 0 : index
    %c0_22 = arith.constant 0 : index
    %25 = vector.load %arg11[%c0_21, %c0_22] : memref<128x128xf32, #tpu.memory_space<vmem>>, vector<128x128xf32>
    tpu.vector_store %arg11[%c0_21, %c0_22], %24 {strides = array<i32>} : memref<128x128xf32, #tpu.memory_space<vmem>>, vector<128x128xf32>,
    %26 = arith.truncf %24 : vector<128x128xf32> to vector<128x128xbf16>
    %c0_23 = arith.constant 0 : index
    %c0_24 = arith.constant 0 : index
    %27 = vector.load %arg9[%c0_23, %c0_24] : memref<128x128xbf16, #tpu.memory_space<vmem>>, vector<128x128xbf16>
    %cst_25 = arith.constant dense<0.000000e+00> : vector<128x128xf32>
    %28 = tpu.matmul %27, %26, %cst_25 {dimension_numbers = #tpu.dot_dimension_numbers<[1], [0], [0], [1], [0, 0, 1, 1], [], []>} : vector<128x128xbf16>, vector<128x128xbf16>, vector<128x128xf32> -> vector<128x128xf32>
    %c0_26 = arith.constant 0 : index
    %c0_27 = arith.constant 0 : index
    %29 = vector.load %arg10[%c0_26, %c0_27] : memref<128x128xbf16, #tpu.memory_space<vmem>>, vector<128x128xbf16>
    %cst_28 = arith.constant dense<0.000000e+00> : vector<128x128xf32>
    %30 = tpu.matmul %29, %26, %cst_28 {dimension_numbers = #tpu.dot_dimension_numbers<[1], [0], [0], [1], [0, 0, 1, 1], [], []>} : vector<128x128xbf16>, vector<128x128xbf16>, vector<128x128xf32> -> vector<128x128xf32>
    %31 = arith.mulf %28, %30 : vector<128x128xf32>
    %cst_29 = arith.constant dense<0.000000e+00> : vector<128xf32>
    %32 = vector.multi_reduction <add>, %31, %cst_29 [1] : vector<128x128xf32> to vector<128xf32>
    %33 = vector.shape_cast %32 : vector<128xf32> to vector<128x1xf32>
    %c0_30 = arith.constant 0 : index
    %c0_31 = arith.constant 0 : index
    %34 = vector.load %arg12[%c0_30, %c0_31] : memref<128x1xf32, #tpu.memory_space<vmem>>, vector<128x1xf32>
    tpu.vector_store %arg12[%c0_30, %c0_31], %33 {strides = array<i32>} : memref<128x1xf32, #tpu.memory_space<vmem>>, vector<128x1xf32>,
    return
  }
  func.func @transform_0(%arg0: i32) -> (i32, i32) {
    %c0_i32 = arith.constant 0 : i32
    %c0_i32_0 = arith.constant 0 : i32
    %c0_i32_1 = arith.constant 0 : i32
    return %c0_i32, %c0_i32_0 : i32, i32
  }
  func.func @transform_1(%arg0: i32) -> (i32, i32) {
    %c0_i32 = arith.constant 0 : i32
    %c0_i32_0 = arith.constant 0 : i32
    %c0_i32_1 = arith.constant 0 : i32
    return %c0_i32, %c0_i32_0 : i32, i32
  }
  func.func @transform_2(%arg0: i32) -> (i32, i32) {
    %c0_i32 = arith.constant 0 : i32
    %c0_i32_0 = arith.constant 0 : i32
    %c0_i32_1 = arith.constant 0 : i32
    return %c0_i32, %c0_i32_0 : i32, i32
  }
  func.func @transform_3(%arg0: i32) -> (i32, i32) {
    %c0_i32 = arith.constant 0 : i32
    %c0_i32_0 = arith.constant 0 : i32
    %c0_i32_1 = arith.constant 0 : i32
    return %c0_i32, %c0_i32_0 : i32, i32
  }
  func.func @transform_4(%arg0: i32) -> (i32, i32) {
    %c0_i32 = arith.constant 0 : i32
    %c0_i32_0 = arith.constant 0 : i32
    %c0_i32_1 = arith.constant 0 : i32
    return %c0_i32, %c0_i32_0 : i32, i32
  }
  func.func @transform_5(%arg0: i32) -> (i32, i32) {
    %c0_i32 = arith.constant 0 : i32
    %c0_i32_0 = arith.constant 0 : i32
    %c0_i32_1 = arith.constant 0 : i32
    return %c0_i32, %c0_i32_0 : i32, i32
  }
  func.func @transform_6(%arg0: i32) -> (i32, i32) {
    %c0_i32 = arith.constant 0 : i32
    %c0_i32_0 = arith.constant 0 : i32
    %c0_i32_1 = arith.constant 0 : i32
    return %c0_i32, %c0_i32_0 : i32, i32
  }
  func.func @transform_7(%arg0: i32) -> (i32, i32) {
    %c0_i32 = arith.constant 0 : i32
    %c0_i32_0 = arith.constant 0 : i32
    %c0_i32_1 = arith.constant 0 : i32
    return %c0_i32, %c0_i32_0 : i32, i32
  }
  func.func @transform_8(%arg0: i32) -> (i32, i32) {
    %c0_i32 = arith.constant 0 : i32
    %c0_i32_0 = arith.constant 0 : i32
    %c0_i32_1 = arith.constant 0 : i32
    return %c0_i32, %c0_i32_0 : i32, i32
  }
  func.func @transform_9(%arg0: i32) -> (i32, i32) {
    %c0_i32 = arith.constant 0 : i32
    %c0_i32_0 = arith.constant 0 : i32
    %c0_i32_1 = arith.constant 0 : i32
    return %c0_i32, %c0_i32_0 : i32, i32
  }
  func.func @transform_10(%arg0: i32) -> (i32, i32) {
    %c0_i32 = arith.constant 0 : i32
    %c0_i32_0 = arith.constant 0 : i32
    %c0_i32_1 = arith.constant 0 : i32
    return %c0_i32, %c0_i32_0 : i32, i32
  }
  func.func @transform_11(%arg0: i32) -> (i32, i32) {
    %c0_i32 = arith.constant 0 : i32
    %c0_i32_0 = arith.constant 0 : i32
    %c0_i32_1 = arith.constant 0 : i32
    return %c0_i32, %c0_i32_0 : i32, i32
  }
}

</mosaic_0001>

<llo_original>
// kernel: movie_user_forward.1
$region0: #{movie_user_forward.1}
  #allocation0 [shape = 'u32[]', space=smem, size = 0x4, offset = 0x4, fixed_abs, tag = 'smem constant byte address 0x4 - core index']
  #allocation1 [shape = 'u32[144,128]{1,0:T(1,128)}', space=vmem, size = 0x12000, scoped, tag = 'internal scratch']
  %s0 = inlined_call_operand.hbm [shape: bf16[128,128], index: 0, kind: input, shape index: {}]
  %s1 = inlined_call_operand.hbm [shape: bf16[128,128], index: 1, kind: input, shape index: {}]
  %s2 = inlined_call_operand.hbm [shape: bf16[128,128], index: 2, kind: input, shape index: {}]
  %s3 = inlined_call_operand.hbm [shape: bf16[128,128], index: 3, kind: input, shape index: {}]
  %s4 = inlined_call_operand.hbm [shape: f32[1,128], index: 4, kind: input, shape index: {}]
  %s5 = inlined_call_operand.hbm [shape: bf16[128,128], index: 5, kind: input, shape index: {}]
  %s6 = inlined_call_operand.hbm [shape: bf16[128,128], index: 6, kind: input, shape index: {}]
  %s7 = inlined_call_operand.hbm [shape: f32[1,128], index: 7, kind: input, shape index: {}]
  %s8 = inlined_call_operand.hbm [shape: bf16[128,128], index: 8, kind: input, shape index: {}]
  %s9 = inlined_call_operand.hbm [shape: bf16[128,128], index: 9, kind: input, shape index: {}]
  %s10 = inlined_call_operand.hbm [shape: f32[128,128], index: 10, kind: output, shape index: {0}]
  %s11 = inlined_call_operand.hbm [shape: f32[128,1], index: 11, kind: output, shape index: {1}]
  %12 = xla_tuple %s10, %s11
  %s13 = sld [smem:[#allocation0]]
  $region98: #{movie_user_forward.1} parent=0
    _
  %s15 = ssub.s32 1, %s13
  %s16 = scalar_select 0, %s15, %s13
  $region1: #{movie_user_forward.1} parent=0
    #allocation2 [shape = 'u8[32768]{0}', space=vmem, size = 0x8000, scoped, tag = 'input window, operand 0, single buffered']
    #allocation3 [shape = 's32[1]{0}', space=sflag, size = 0x4, scoped, tag = 'scoped memory for movie_user_forward.1']
    #allocation4 [shape = 's32[1]{0}', space=sflag, size = 0x4, scoped, tag = 'scoped memory for movie_user_forward.1']
    #allocation5 [shape = 'u8[32768]{0}', space=vmem, size = 0x8000, scoped, tag = 'input window, operand 1, single buffered']
    #allocation6 [shape = 's32[1]{0}', space=sflag, size = 0x4, scoped, tag = 'scoped memory for movie_user_forward.1']
    #allocation7 [shape = 'u8[32768]{0}', space=vmem, size = 0x8000, scoped, tag = 'input window, operand 2, single buffered']
    #allocation8 [shape = 'u8[32768]{0}', space=vmem, size = 0x8000, scoped, tag = 'input window, operand 3, single buffered']
    #allocation9 [shape = 's32[1]{0}', space=sflag, size = 0x4, scoped, tag = 'scoped memory for movie_user_forward.1']
    #allocation10 [shape = 'u8[512]{0}', space=vmem, size = 0x400, scoped, tag = 'input window, operand 4, single buffered']
    #allocation11 [shape = 'u8[32768]{0}', space=vmem, size = 0x8000, scoped, tag = 'input window, operand 5, single buffered']
    #allocation12 [shape = 's32[1]{0}', space=sflag, size = 0x4, scoped, tag = 'scoped memory for movie_user_forward.1']
    #allocation13 [shape = 'u8[32768]{0}', space=vmem, size = 0x8000, scoped, tag = 'input window, operand 6, single buffered']
    #allocation14 [shape = 'u8[512]{0}', space=vmem, size = 0x400, scoped, tag = 'input window, operand 7, single buffered']
    #allocation15 [shape = 's32[1]{0}', space=sflag, size = 0x4, scoped, tag = 'scoped memory for movie_user_forward.1']
    #allocation16 [shape = 'u8[32768]{0}', space=vmem, size = 0x8000, scoped, tag = 'input window, operand 8, single buffered']
    #allocation17 [shape = 'u8[32768]{0}', space=vmem, size = 0x8000, scoped, tag = 'input window, operand 9, single buffered']
    #allocation18 [shape = 's32[1]{0}', space=sflag, size = 0x4, scoped, tag = 'scoped memory for movie_user_forward.1']
    #allocation19 [shape = 'u8[65536]{0}', space=vmem, size = 0x10000, scoped, tag = 'output window, operand 0, single buffered']
    #allocation20 [shape = 'u8[65536]{0}', space=vmem, size = 0x10000, scoped, tag = 'output window, operand 1, single buffered']
    #allocation21 [shape = 's32[1]{0}', space=sflag, size = 0x4, scoped, tag = 'scoped memory for movie_user_forward.1']
    %17 = vsyncpa [#allocation3], 0
    %18 = vsyncpa [#allocation6], 0
    %19 = vsyncpa [#allocation9], 0
    %20 = vsyncpa [#allocation12], 0
    %21 = vsyncpa [#allocation15], 0
    %22 = vsyncpa [#allocation18], 0
    %23 = vsyncpa [#allocation4], 0
    %24 = vsyncpa [#allocation21], 0
    // Predicated region
    $region2: #{movie_user_forward.1} parent=1 // pred_check
      _
    $region3: #{movie_user_forward.1} parent=1 // pred_check_branch
      %26 = sbr.rel (0) target = $region5
    $region4: #{movie_user_forward.1} parent=1 // pred_region
      %s28 = ssub.s32 1024, 1024
      %29 = vsyncadd [#allocation3], %s28
      %s30 = sshll.u32 [#allocation2], 4
      %s31 = int_to_ptr.vmem [resolvable:$true] %s30
      %36 = dma.hbm_to_vmem [thread:$0]  %s0, 1024, %s31, [#allocation3], 64, 64, 4
    $region5: #{movie_user_forward.1} parent=1 // pred_fallthru
      _
    // Predicated region
    $region6: #{movie_user_forward.1} parent=1 // pred_check
      _
    $region7: #{movie_user_forward.1} parent=1 // pred_check_branch
      %38 = sbr.rel (0) target = $region9
    $region8: #{movie_user_forward.1} parent=1 // pred_region
      %s40 = ssub.s32 1024, 1024
      %41 = vsyncadd [#allocation6], %s40
      %s42 = sshll.u32 [#allocation5], 4
      %s43 = int_to_ptr.vmem [resolvable:$true] %s42
      %48 = dma.hbm_to_vmem [thread:$0]  %s1, 1024, %s43, [#allocation6], 64, 64, 4
    $region9: #{movie_user_forward.1} parent=1 // pred_fallthru
      _
    // Predicated region
    $region10: #{movie_user_forward.1} parent=1 // pred_check
      _
    $region11: #{movie_user_forward.1} parent=1 // pred_check_branch
      %50 = sbr.rel (0) target = $region13
    $region12: #{movie_user_forward.1} parent=1 // pred_region
      %s52 = ssub.s32 1024, 1024
      %53 = vsyncadd [#allocation6], %s52
      %s54 = sshll.u32 [#allocation7], 4
      %s55 = int_to_ptr.vmem [resolvable:$true] %s54
      %60 = dma.hbm_to_vmem [thread:$0]  %s2, 1024, %s55, [#allocation6], 64, 64, 4
    $region13: #{movie_user_forward.1} parent=1 // pred_fallthru
      _
    // Predicated region
    $region14: #{movie_user_forward.1} parent=1 // pred_check
      _
    $region15: #{movie_user_forward.1} parent=1 // pred_check_branch
      %62 = sbr.rel (0) target = $region17
    $region16: #{movie_user_forward.1} parent=1 // pred_region
      %s64 = ssub.s32 1024, 1024
      %65 = vsyncadd [#allocation9], %s64
      %s66 = sshll.u32 [#allocation8], 4
      %s67 = int_to_ptr.vmem [resolvable:$true] %s66
      %72 = dma.hbm_to_vmem [thread:$0]  %s3, 1024, %s67, [#allocation9], 64, 64, 4
    $region17: #{movie_user_forward.1} parent=1 // pred_fallthru
      _
    // Predicated region
    $region18: #{movie_user_forward.1} parent=1 // pred_check
      _
    $region19: #{movie_user_forward.1} parent=1 // pred_check_branch
      %74 = sbr.rel (0) target = $region21
    $region20: #{movie_user_forward.1} parent=1 // pred_region
      %s76 = ssub.s32 16, 16
      %77 = vsyncadd [#allocation9], %s76
      %s79 = sshll.u32 [#allocation10], 4
      %s80 = int_to_ptr.vmem [resolvable:$true] %s79
      %82 = dma.hbm_to_vmem [thread:$0]  %s4, 16, %s80, [#allocation9]
    $region21: #{movie_user_forward.1} parent=1 // pred_fallthru
      _
    // Predicated region
    $region22: #{movie_user_forward.1} parent=1 // pred_check
      _
    $region23: #{movie_user_forward.1} parent=1 // pred_check_branch
      %84 = sbr.rel (0) target = $region25
    $region24: #{movie_user_forward.1} parent=1 // pred_region
      %s86 = ssub.s32 1024, 1024
      %87 = vsyncadd [#allocation12], %s86
      %s88 = sshll.u32 [#allocation11], 4
      %s89 = int_to_ptr.vmem [resolvable:$true] %s88
      %94 = dma.hbm_to_vmem [thread:$0]  %s5, 1024, %s89, [#allocation12], 64, 64, 4
    $region25: #{movie_user_forward.1} parent=1 // pred_fallthru
      _
    // Predicated region
    $region26: #{movie_user_forward.1} parent=1 // pred_check
      _
    $region27: #{movie_user_forward.1} parent=1 // pred_check_branch
      %96 = sbr.rel (0) target = $region29
    $region28: #{movie_user_forward.1} parent=1 // pred_region
      %s98 = ssub.s32 1024, 1024
      %99 = vsyncadd [#allocation12], %s98
      %s100 = sshll.u32 [#allocation13], 4
      %s101 = int_to_ptr.vmem [resolvable:$true] %s100
      %106 = dma.hbm_to_vmem [thread:$0]  %s6, 1024, %s101, [#allocation12], 64, 64, 4
    $region29: #{movie_user_forward.1} parent=1 // pred_fallthru
      _
    // Predicated region
    $region30: #{movie_user_forward.1} parent=1 // pred_check
      _
    $region31: #{movie_user_forward.1} parent=1 // pred_check_branch
      %108 = sbr.rel (0) target = $region33
    $region32: #{movie_user_forward.1} parent=1 // pred_region
      %s110 = ssub.s32 16, 16
      %111 = vsyncadd [#allocation15], %s110
      %s113 = sshll.u32 [#allocation14], 4
      %s114 = int_to_ptr.vmem [resolvable:$true] %s113
      %116 = dma.hbm_to_vmem [thread:$0]  %s7, 16, %s114, [#allocation15]
    $region33: #{movie_user_forward.1} parent=1 // pred_fallthru
      _
    // Predicated region
    $region34: #{movie_user_forward.1} parent=1 // pred_check
      _
    $region35: #{movie_user_forward.1} parent=1 // pred_check_branch
      %118 = sbr.rel (0) target = $region37
    $region36: #{movie_user_forward.1} parent=1 // pred_region
      %s120 = ssub.s32 1024, 1024
      %121 = vsyncadd [#allocation15], %s120
      %s122 = sshll.u32 [#allocation16], 4
      %s123 = int_to_ptr.vmem [resolvable:$true] %s122
      %128 = dma.hbm_to_vmem [thread:$0]  %s8, 1024, %s123, [#allocation15], 64, 64, 4
    $region37: #{movie_user_forward.1} parent=1 // pred_fallthru
      _
    // Predicated region
    $region38: #{movie_user_forward.1} parent=1 // pred_check
      _
    $region39: #{movie_user_forward.1} parent=1 // pred_check_branch
      %130 = sbr.rel (0) target = $region41
    $region40: #{movie_user_forward.1} parent=1 // pred_region
      %s132 = ssub.s32 1024, 1024
      %133 = vsyncadd [#allocation18], %s132
      %s134 = sshll.u32 [#allocation17], 4
      %s135 = int_to_ptr.vmem [resolvable:$true] %s134
      %140 = dma.hbm_to_vmem [thread:$0]  %s9, 1024, %s135, [#allocation18], 64, 64, 4
    $region41: #{movie_user_forward.1} parent=1 // pred_fallthru
      _
    // Predicated region
    $region42: #{movie_user_forward.1} parent=1 // pred_check
      _
    $region43: #{movie_user_forward.1} parent=1 // pred_check_branch
      %142 = sbr.rel (0) target = $region45
    $region44: #{movie_user_forward.1} parent=1 // pred_region
      %143 = dma.done [#allocation3], 1024
    $region45: #{movie_user_forward.1} parent=1 // pred_fallthru
      _
    // Predicated region
    $region46: #{movie_user_forward.1} parent=1 // pred_check
      _
    $region47: #{movie_user_forward.1} parent=1 // pred_check_branch
      %145 = sbr.rel (0) target = $region49
    $region48: #{movie_user_forward.1} parent=1 // pred_region
      %146 = dma.done [#allocation6], 1024
    $region49: #{movie_user_forward.1} parent=1 // pred_fallthru
      _
    // Predicated region
    $region50: #{movie_user_forward.1} parent=1 // pred_check
      _
    $region51: #{movie_user_forward.1} parent=1 // pred_check_branch
      %148 = sbr.rel (0) target = $region53
    $region52: #{movie_user_forward.1} parent=1 // pred_region
      %149 = dma.done [#allocation6], 1024
    $region53: #{movie_user_forward.1} parent=1 // pred_fallthru
      _
    // Predicated region
    $region54: #{movie_user_forward.1} parent=1 // pred_check
      _
    $region55: #{movie_user_forward.1} parent=1 // pred_check_branch
      %151 = sbr.rel (0) target = $region57
    $region56: #{movie_user_forward.1} parent=1 // pred_region
      %152 = dma.done [#allocation9], 1024
    $region57: #{movie_user_forward.1} parent=1 // pred_fallthru
      _
    // Predicated region
    $region58: #{movie_user_forward.1} parent=1 // pred_check
      _
    $region59: #{movie_user_forward.1} parent=1 // pred_check_branch
      %154 = sbr.rel (0) target = $region61
    $region60: #{movie_user_forward.1} parent=1 // pred_region
      %155 = dma.done [#allocation9], 16
    $region61: #{movie_user_forward.1} parent=1 // pred_fallthru
      _
    // Predicated region
    $region62: #{movie_user_forward.1} parent=1 // pred_check
      _
    $region63: #{movie_user_forward.1} parent=1 // pred_check_branch
      %157 = sbr.rel (0) target = $region65
    $region64: #{movie_user_forward.1} parent=1 // pred_region
      %158 = dma.done [#allocation12], 1024
    $region65: #{movie_user_forward.1} parent=1 // pred_fallthru
      _
    // Predicated region
    $region66: #{movie_user_forward.1} parent=1 // pred_check
      _
    $region67: #{movie_user_forward.1} parent=1 // pred_check_branch
      %160 = sbr.rel (0) target = $region69
    $region68: #{movie_user_forward.1} parent=1 // pred_region
      %161 = dma.done [#allocation12], 1024
    $region69: #{movie_user_forward.1} parent=1 // pred_fallthru
      _
    // Predicated region
    $region70: #{movie_user_forward.1} parent=1 // pred_check
      _
    $region71: #{movie_user_forward.1} parent=1 // pred_check_branch
      %163 = sbr.rel (0) target = $region73
    $region72: #{movie_user_forward.1} parent=1 // pred_region
      %164 = dma.done [#allocation15], 16
    $region73: #{movie_user_forward.1} parent=1 // pred_fallthru
      _
    // Predicated region
    $region74: #{movie_user_forward.1} parent=1 // pred_check
      _
    $region75: #{movie_user_forward.1} parent=1 // pred_check_branch
      %166 = sbr.rel (0) target = $region77
    $region76: #{movie_user_forward.1} parent=1 // pred_region
      %167 = dma.done [#allocation15], 1024
    $region77: #{movie_user_forward.1} parent=1 // pred_fallthru
      _
    // Predicated region
    $region78: #{movie_user_forward.1} parent=1 // pred_check
      _
    $region79: #{movie_user_forward.1} parent=1 // pred_check_branch
      %169 = sbr.rel (0) target = $region81
    $region80: #{movie_user_forward.1} parent=1 // pred_region
      %170 = dma.done [#allocation18], 1024
    $region81: #{movie_user_forward.1} parent=1 // pred_fallthru
      _
    %v172 = vld [vmem:[#allocation2] sm:$0xf]
    %v173 = vld [vmem:[#allocation2 + $0x4] sm:$0xf]
    %v174 = vld [vmem:[#allocation2 + $0x8] sm:$0xf]
    %v175 = vld [vmem:[#allocation2 + $0xc] sm:$0xf]
    %v176 = vld [vmem:[#allocation2 + $0x10] sm:$0xf]
    %v177 = vld [vmem:[#allocation2 + $0x14] sm:$0xf]
    %v178 = vld [vmem:[#allocation2 + $0x18] sm:$0xf]
    %v179 = vld [vmem:[#allocation2 + $0x1c] sm:$0xf]
    %v180 = vld [vmem:[#allocation2 + $0x20] sm:$0xf]
    %v181 = vld [vmem:[#allocation2 + $0x24] sm:$0xf]
    %v182 = vld [vmem:[#allocation2 + $0x28] sm:$0xf]
    %v183 = vld [vmem:[#allocation2 + $0x2c] sm:$0xf]
    %v184 = vld [vmem:[#allocation2 + $0x30] sm:$0xf]
    %v185 = vld [vmem:[#allocation2 + $0x34] sm:$0xf]
    %v186 = vld [vmem:[#allocation2 + $0x38] sm:$0xf]
    %v187 = vld [vmem:[#allocation2 + $0x3c] sm:$0xf]
    %v188 = vld [vmem:[#allocation5] sm:$0xf]
    %v189 = vld [vmem:[#allocation5 + $0x4] sm:$0xf]
    %v190 = vld [vmem:[#allocation5 + $0x8] sm:$0xf]
    %v191 = vld [vmem:[#allocation5 + $0xc] sm:$0xf]
    %v192 = vld [vmem:[#allocation5 + $0x10] sm:$0xf]
    %v193 = vld [vmem:[#allocation5 + $0x14] sm:$0xf]
    %v194 = vld [vmem:[#allocation5 + $0x18] sm:$0xf]
    %v195 = vld [vmem:[#allocation5 + $0x1c] sm:$0xf]
    %v196 = vld [vmem:[#allocation5 + $0x20] sm:$0xf]
    %v197 = vld [vmem:[#allocation5 + $0x24] sm:$0xf]
    %v198 = vld [vmem:[#allocation5 + $0x28] sm:$0xf]
    %v199 = vld [vmem:[#allocation5 + $0x2c] sm:$0xf]
    %v200 = vld [vmem:[#allocation5 + $0x30] sm:$0xf]
    %v201 = vld [vmem:[#allocation5 + $0x34] sm:$0xf]
    %v202 = vld [vmem:[#allocation5 + $0x38] sm:$0xf]
    %v203 = vld [vmem:[#allocation5 + $0x3c] sm:$0xf]
    %v220 = vunpack.c.l.b16 %v188
    %v221 = vunpack.c.l.b16 %v189
    %v222 = vunpack.c.l.b16 %v190
    %v223 = vunpack.c.l.b16 %v191
    %v224 = vunpack.c.l.b16 %v192
    %v225 = vunpack.c.l.b16 %v193
    %v226 = vunpack.c.l.b16 %v194
    %v227 = vunpack.c.l.b16 %v195
    %v228 = vunpack.c.l.b16 %v196
    %v229 = vunpack.c.l.b16 %v197
    %v230 = vunpack.c.l.b16 %v198
    %v231 = vunpack.c.l.b16 %v199
    %v232 = vunpack.c.l.b16 %v200
    %v233 = vunpack.c.l.b16 %v201
    %v234 = vunpack.c.l.b16 %v202
    %v235 = vunpack.c.l.b16 %v203
    %v236 = vpack.c.b16 %v221, %v220
    %v237 = vpack.c.b16 %v223, %v222
    %v238 = vpack.c.b16 %v225, %v224
    %v239 = vpack.c.b16 %v227, %v226
    %v240 = vpack.c.b16 %v229, %v228
    %v241 = vpack.c.b16 %v231, %v230
    %v242 = vpack.c.b16 %v233, %v232
    %v243 = vpack.c.b16 %v235, %v234
    %v268 = vunpack.c.l.b16 %v172
    %v269 = vunpack.c.l.b16 %v173
    %v270 = vunpack.c.l.b16 %v174
    %v271 = vunpack.c.l.b16 %v175
    %v272 = vunpack.c.l.b16 %v176
    %v273 = vunpack.c.l.b16 %v177
    %v274 = vunpack.c.l.b16 %v178
    %v275 = vunpack.c.l.b16 %v179
    %v276 = vunpack.c.l.b16 %v180
    %v277 = vunpack.c.l.b16 %v181
    %v278 = vunpack.c.l.b16 %v182
    %v279 = vunpack.c.l.b16 %v183
    %v280 = vunpack.c.l.b16 %v184
    %v281 = vunpack.c.l.b16 %v185
    %v282 = vunpack.c.l.b16 %v186
    %v283 = vunpack.c.l.b16 %v187
    %v284 = vpack.c.b16 %v269, %v268
    %v285 = vpack.c.b16 %v271, %v270
    %v286 = vpack.c.b16 %v273, %v272
    %v287 = vpack.c.b16 %v275, %v274
    %v288 = vpack.c.b16 %v277, %v276
    %v289 = vpack.c.b16 %v279, %v278
    %v290 = vpack.c.b16 %v281, %v280
    %v291 = vpack.c.b16 %v283, %v282
    %300 = vmatprep.subr.bf16.mxu0 0
    %301 = vmatpush1.bf16.msra.mxu0 %v284
    %302 = vmatprep.subr.bf16.mxu0 0
    %303 = vmatpush1.bf16.msra.mxu0 %v285
    %304 = vmatprep.subr.bf16.mxu0 0
    %305 = vmatpush1.bf16.msra.mxu0 %v286
    %306 = vmatprep.subr.bf16.mxu0 0
    %307 = vmatpush1.bf16.msra.mxu0 %v287
    %308 = vmatprep.subr.bf16.mxu0 0
    %309 = vmatpush1.bf16.msra.mxu0 %v288
    %310 = vmatprep.subr.bf16.mxu0 0
    %311 = vmatpush1.bf16.msra.mxu0 %v289
    %312 = vmatprep.subr.bf16.mxu0 0
    %313 = vmatpush1.bf16.msra.mxu0 %v290
    %314 = vmatprep.subr.bf16.mxu0 0
    %315 = vmatpush1.bf16.msra.mxu0 %v291
    %316 = vmatprep.subr.bf16.mxu0 0
    %317 = vmatpush1.bf16.msra.mxu0 0
    %318 = vmatprep.subr.bf16.mxu0 0
    %319 = vmatpush1.bf16.msra.mxu0 0
    %320 = vmatprep.subr.bf16.mxu0 0
    %321 = vmatpush1.bf16.msra.mxu0 0
    %322 = vmatprep.subr.bf16.mxu0 0
    %323 = vmatpush1.bf16.msra.mxu0 0
    %324 = vmatprep.subr.bf16.mxu0 0
    %325 = vmatpush1.bf16.msra.mxu0 0
    %326 = vmatprep.subr.bf16.mxu0 0
    %327 = vmatpush1.bf16.msra.mxu0 0
    %328 = vmatprep.subr.bf16.mxu0 0
    %329 = vmatpush1.bf16.msra.mxu0 0
    %330 = vmatprep.subr.bf16.mxu0 0
    %331 = vmatpush1.bf16.msra.mxu0 0
    %332 = vmatprep.mubr.bf16.mxu0 0
    %333 = vmatmul.mubr.bf16.gmra.mrb[0].mxu0 %v236
    %v334 = vpop.f32.mrb[0].mxu0
    %v335 = vadd.f32 0.0, %v334
    %v336 = vpop.f32.mrb[0].mxu0
    %v337 = vpop.f32.mrb[0].mxu0
    %v338 = vadd.f32 0.0, %v337
    %v339 = vpop.f32.mrb[0].mxu0
    %340 = vmatprep.mubr.bf16.mxu0 0
    %341 = vmatmul.mubr.bf16.gmra.mrb[0].mxu0 %v237
    %v342 = vpop.f32.mrb[0].mxu0
    %v343 = vadd.f32 0.0, %v342
    %v344 = vpop.f32.mrb[0].mxu0
    %v345 = vpop.f32.mrb[0].mxu0
    %v346 = vadd.f32 0.0, %v345
    %v347 = vpop.f32.mrb[0].mxu0
    %348 = vmatprep.mubr.bf16.mxu0 0
    %349 = vmatmul.mubr.bf16.gmra.mrb[0].mxu0 %v238
    %v350 = vpop.f32.mrb[0].mxu0
    %v351 = vadd.f32 0.0, %v350
    %v352 = vpop.f32.mrb[0].mxu0
    %v353 = vpop.f32.mrb[0].mxu0
    %v354 = vadd.f32 0.0, %v353
    %v355 = vpop.f32.mrb[0].mxu0
    %356 = vmatprep.mubr.bf16.mxu0 0
    %357 = vmatmul.mubr.bf16.gmra.mrb[0].mxu0 %v239
    %v358 = vpop.f32.mrb[0].mxu0
    %v359 = vadd.f32 0.0, %v358
    %v360 = vpop.f32.mrb[0].mxu0
    %v361 = vpop.f32.mrb[0].mxu0
    %v362 = vadd.f32 0.0, %v361
    %v363 = vpop.f32.mrb[0].mxu0
    %364 = vmatprep.mubr.bf16.mxu0 0
    %365 = vmatmul.mubr.bf16.gmra.mrb[0].mxu0 %v240
    %v366 = vpop.f32.mrb[0].mxu0
    %v367 = vadd.f32 0.0, %v366
    %v368 = vpop.f32.mrb[0].mxu0
    %v369 = vpop.f32.mrb[0].mxu0
    %v370 = vadd.f32 0.0, %v369
    %v371 = vpop.f32.mrb[0].mxu0
    %372 = vmatprep.mubr.bf16.mxu0 0
    %373 = vmatmul.mubr.bf16.gmra.mrb[0].mxu0 %v241
    %v374 = vpop.f32.mrb[0].mxu0
    %v375 = vadd.f32 0.0, %v374
    %v376 = vpop.f32.mrb[0].mxu0
    %v377 = vpop.f32.mrb[0].mxu0
    %v378 = vadd.f32 0.0, %v377
    %v379 = vpop.f32.mrb[0].mxu0
    %380 = vmatprep.mubr.bf16.mxu0 0
    %381 = vmatmul.mubr.bf16.gmra.mrb[0].mxu0 %v242
    %v382 = vpop.f32.mrb[0].mxu0
    %v383 = vadd.f32 0.0, %v382
    %v384 = vpop.f32.mrb[0].mxu0
    %v385 = vpop.f32.mrb[0].mxu0
    %v386 = vadd.f32 0.0, %v385
    %v387 = vpop.f32.mrb[0].mxu0
    %388 = vmatprep.mubr.bf16.mxu0 0
    %389 = vmatmul.mubr.bf16.gmra.mrb[0].mxu0 %v243
    %v390 = vpop.f32.mrb[0].mxu0
    %v391 = vadd.f32 0.0, %v390
    %v392 = vpop.f32.mrb[0].mxu0
    %v393 = vpop.f32.mrb[0].mxu0
    %v394 = vadd.f32 0.0, %v393
    %v395 = vpop.f32.mrb[0].mxu0
    %396 = vdwg.mxu0
    %v397 = vld [vmem:[#allocation7] sm:$0xf]
    %v398 = vld [vmem:[#allocation7 + $0x4] sm:$0xf]
    %v399 = vld [vmem:[#allocation7 + $0x8] sm:$0xf]
    %v400 = vld [vmem:[#allocation7 + $0xc] sm:$0xf]
    %v401 = vld [vmem:[#allocation7 + $0x10] sm:$0xf]
    %v402 = vld [vmem:[#allocation7 + $0x14] sm:$0xf]
    %v403 = vld [vmem:[#allocation7 + $0x18] sm:$0xf]
    %v404 = vld [vmem:[#allocation7 + $0x1c] sm:$0xf]
    %v405 = vld [vmem:[#allocation7 + $0x20] sm:$0xf]
    %v406 = vld [vmem:[#allocation7 + $0x24] sm:$0xf]
    %v407 = vld [vmem:[#allocation7 + $0x28] sm:$0xf]
    %v408 = vld [vmem:[#allocation7 + $0x2c] sm:$0xf]
    %v409 = vld [vmem:[#allocation7 + $0x30] sm:$0xf]
    %v410 = vld [vmem:[#allocation7 + $0x34] sm:$0xf]
    %v411 = vld [vmem:[#allocation7 + $0x38] sm:$0xf]
    %v412 = vld [vmem:[#allocation7 + $0x3c] sm:$0xf]
    %v413 = vpack.c.bf16 %v338, %v335
    %v414 = vpack.c.bf16 %v346, %v343
    %v415 = vpack.c.bf16 %v354, %v351
    %v416 = vpack.c.bf16 %v362, %v359
    %v417 = vpack.c.bf16 %v370, %v367
    %v418 = vpack.c.bf16 %v378, %v375
    %v419 = vpack.c.bf16 %v386, %v383
    %v420 = vpack.c.bf16 %v394, %v391
    %v421 = vld [vmem:[#allocation8] sm:$0xf]
    %v422 = vld [vmem:[#allocation8 + $0x4] sm:$0xf]
    %v423 = vld [vmem:[#allocation8 + $0x8] sm:$0xf]
    %v424 = vld [vmem:[#allocation8 + $0xc] sm:$0xf]
    %v425 = vld [vmem:[#allocation8 + $0x10] sm:$0xf]
    %v426 = vld [vmem:[#allocation8 + $0x14] sm:$0xf]
    %v427 = vld [vmem:[#allocation8 + $0x18] sm:$0xf]
    %v428 = vld [vmem:[#allocation8 + $0x1c] sm:$0xf]
    %v429 = vld [vmem:[#allocation8 + $0x20] sm:$0xf]
    %v430 = vld [vmem:[#allocation8 + $0x24] sm:$0xf]
    %v431 = vld [vmem:[#allocation8 + $0x28] sm:$0xf]
    %v432 = vld [vmem:[#allocation8 + $0x2c] sm:$0xf]
    %v433 = vld [vmem:[#allocation8 + $0x30] sm:$0xf]
    %v434 = vld [vmem:[#allocation8 + $0x34] sm:$0xf]
    %v435 = vld [vmem:[#allocation8 + $0x38] sm:$0xf]
    %v436 = vld [vmem:[#allocation8 + $0x3c] sm:$0xf]
    %v453 = vunpack.c.l.b16 %v421
    %v454 = vunpack.c.l.b16 %v422
    %v455 = vunpack.c.l.b16 %v423
    %v456 = vunpack.c.l.b16 %v424
    %v457 = vunpack.c.l.b16 %v425
    %v458 = vunpack.c.l.b16 %v426
    %v459 = vunpack.c.l.b16 %v427
    %v460 = vunpack.c.l.b16 %v428
    %v461 = vunpack.c.l.b16 %v429
    %v462 = vunpack.c.l.b16 %v430
    %v463 = vunpack.c.l.b16 %v431
    %v464 = vunpack.c.l.b16 %v432
    %v465 = vunpack.c.l.b16 %v433
    %v466 = vunpack.c.l.b16 %v434
    %v467 = vunpack.c.l.b16 %v435
    %v468 = vunpack.c.l.b16 %v436
    %v469 = vpack.c.b16 %v454, %v453
    %v470 = vpack.c.b16 %v456, %v455
    %v471 = vpack.c.b16 %v458, %v457
    %v472 = vpack.c.b16 %v460, %v459
    %v473 = vpack.c.b16 %v462, %v461
    %v474 = vpack.c.b16 %v464, %v463
    %v475 = vpack.c.b16 %v466, %v465
    %v476 = vpack.c.b16 %v468, %v467
    %485 = vmatprep.subr.bf16.mxu0 0
    %486 = vmatpush1.bf16.msra.mxu0 %v469
    %487 = vmatprep.subr.bf16.mxu0 0
    %488 = vmatpush1.bf16.msra.mxu0 %v470
    %489 = vmatprep.subr.bf16.mxu0 0
    %490 = vmatpush1.bf16.msra.mxu0 %v471
    %491 = vmatprep.subr.bf16.mxu0 0
    %492 = vmatpush1.bf16.msra.mxu0 %v472
    %493 = vmatprep.subr.bf16.mxu0 0
    %494 = vmatpush1.bf16.msra.mxu0 %v473
    %495 = vmatprep.subr.bf16.mxu0 0
    %496 = vmatpush1.bf16.msra.mxu0 %v474
    %497 = vmatprep.subr.bf16.mxu0 0
    %498 = vmatpush1.bf16.msra.mxu0 %v475
    %499 = vmatprep.subr.bf16.mxu0 0
    %500 = vmatpush1.bf16.msra.mxu0 %v476
    %501 = vmatprep.subr.bf16.mxu0 0
    %502 = vmatpush1.bf16.msra.mxu0 0
    %503 = vmatprep.subr.bf16.mxu0 0
    %504 = vmatpush1.bf16.msra.mxu0 0
    %505 = vmatprep.subr.bf16.mxu0 0
    %506 = vmatpush1.bf16.msra.mxu0 0
    %507 = vmatprep.subr.bf16.mxu0 0
    %508 = vmatpush1.bf16.msra.mxu0 0
    %509 = vmatprep.subr.bf16.mxu0 0
    %510 = vmatpush1.bf16.msra.mxu0 0
    %511 = vmatprep.subr.bf16.mxu0 0
    %512 = vmatpush1.bf16.msra.mxu0 0
    %513 = vmatprep.subr.bf16.mxu0 0
    %514 = vmatpush1.bf16.msra.mxu0 0
    %515 = vmatprep.subr.bf16.mxu0 0
    %516 = vmatpush1.bf16.msra.mxu0 0
    %517 = vmatprep.mubr.bf16.mxu0 0
    %518 = vmatmul.mubr.bf16.gmra.mrb[0].mxu0 %v413
    %v519 = vpop.f32.mrb[0].mxu0
    %v520 = vadd.f32 0.0, %v519
    %v521 = vpop.f32.mrb[0].mxu0
    %v522 = vpop.f32.mrb[0].mxu0
    %v523 = vadd.f32 0.0, %v522
    %v524 = vpop.f32.mrb[0].mxu0
    %525 = vmatprep.mubr.bf16.mxu0 0
    %526 = vmatmul.mubr.bf16.gmra.mrb[0].mxu0 %v414
    %v527 = vpop.f32.mrb[0].mxu0
    %v528 = vadd.f32 0.0, %v527
    %v529 = vpop.f32.mrb[0].mxu0
    %v530 = vpop.f32.mrb[0].mxu0
    %v531 = vadd.f32 0.0, %v530
    %v532 = vpop.f32.mrb[0].mxu0
    %533 = vmatprep.mubr.bf16.mxu0 0
    %534 = vmatmul.mubr.bf16.gmra.mrb[0].mxu0 %v415
    %v535 = vpop.f32.mrb[0].mxu0
    %v536 = vadd.f32 0.0, %v535
    %v537 = vpop.f32.mrb[0].mxu0
    %v538 = vpop.f32.mrb[0].mxu0
    %v539 = vadd.f32 0.0, %v538
    %v540 = vpop.f32.mrb[0].mxu0
    %541 = vmatprep.mubr.bf16.mxu0 0
    %542 = vmatmul.mubr.bf16.gmra.mrb[0].mxu0 %v416
    %v543 = vpop.f32.mrb[0].mxu0
    %v544 = vadd.f32 0.0, %v543
    %v545 = vpop.f32.mrb[0].mxu0
    %v546 = vpop.f32.mrb[0].mxu0
    %v547 = vadd.f32 0.0, %v546
    %v548 = vpop.f32.mrb[0].mxu0
    %549 = vmatprep.mubr.bf16.mxu0 0
    %550 = vmatmul.mubr.bf16.gmra.mrb[0].mxu0 %v417
    %v551 = vpop.f32.mrb[0].mxu0
    %v552 = vadd.f32 0.0, %v551
    %v553 = vpop.f32.mrb[0].mxu0
    %v554 = vpop.f32.mrb[0].mxu0
    %v555 = vadd.f32 0.0, %v554
    %v556 = vpop.f32.mrb[0].mxu0
    %557 = vmatprep.mubr.bf16.mxu0 0
    %558 = vmatmul.mubr.bf16.gmra.mrb[0].mxu0 %v418
    %v559 = vpop.f32.mrb[0].mxu0
    %v560 = vadd.f32 0.0, %v559
    %v561 = vpop.f32.mrb[0].mxu0
    %v562 = vpop.f32.mrb[0].mxu0
    %v563 = vadd.f32 0.0, %v562
    %v564 = vpop.f32.mrb[0].mxu0
    %565 = vmatprep.mubr.bf16.mxu0 0
    %566 = vmatmul.mubr.bf16.gmra.mrb[0].mxu0 %v419
    %v567 = vpop.f32.mrb[0].mxu0
    %v568 = vadd.f32 0.0, %v567
    %v569 = vpop.f32.mrb[0].mxu0
    %v570 = vpop.f32.mrb[0].mxu0
    %v571 = vadd.f32 0.0, %v570
    %v572 = vpop.f32.mrb[0].mxu0
    %573 = vmatprep.mubr.bf16.mxu0 0
    %574 = vmatmul.mubr.bf16.gmra.mrb[0].mxu0 %v420
    %v575 = vpop.f32.mrb[0].mxu0
    %v576 = vadd.f32 0.0, %v575
    %v577 = vpop.f32.mrb[0].mxu0
    %v578 = vpop.f32.mrb[0].mxu0
    %v579 = vadd.f32 0.0, %v578
    %v580 = vpop.f32.mrb[0].mxu0
    %581 = vdwg.mxu0
    %v598 = vunpack.c.l.b16 %v397
    %v599 = vunpack.c.l.b16 %v398
    %v600 = vunpack.c.l.b16 %v399
    %v601 = vunpack.c.l.b16 %v400
    %v602 = vunpack.c.l.b16 %v401
    %v603 = vunpack.c.l.b16 %v402
    %v604 = vunpack.c.l.b16 %v403
    %v605 = vunpack.c.l.b16 %v404
    %v606 = vunpack.c.l.b16 %v405
    %v607 = vunpack.c.l.b16 %v406
    %v608 = vunpack.c.l.b16 %v407
    %v609 = vunpack.c.l.b16 %v408
    %v610 = vunpack.c.l.b16 %v409
    %v611 = vunpack.c.l.b16 %v410
    %v612 = vunpack.c.l.b16 %v411
    %v613 = vunpack.c.l.b16 %v412
    %v614 = vpack.c.b16 %v599, %v598
    %v615 = vpack.c.b16 %v601, %v600
    %v616 = vpack.c.b16 %v603, %v602
    %v617 = vpack.c.b16 %v605, %v604
    %v618 = vpack.c.b16 %v607, %v606
    %v619 = vpack.c.b16 %v609, %v608
    %v620 = vpack.c.b16 %v611, %v610
    %v621 = vpack.c.b16 %v613, %v612
    %630 = vmatprep.subr.bf16.mxu0 0
    %631 = vmatpush1.bf16.msra.mxu0 %v614
    %632 = vmatprep.subr.bf16.mxu0 0
    %633 = vmatpush1.bf16.msra.mxu0 %v615
    %634 = vmatprep.subr.bf16.mxu0 0
    %635 = vmatpush1.bf16.msra.mxu0 %v616
    %636 = vmatprep.subr.bf16.mxu0 0
    %637 = vmatpush1.bf16.msra.mxu0 %v617
    %638 = vmatprep.subr.bf16.mxu0 0
    %639 = vmatpush1.bf16.msra.mxu0 %v618
    %640 = vmatprep.subr.bf16.mxu0 0
    %641 = vmatpush1.bf16.msra.mxu0 %v619
    %642 = vmatprep.subr.bf16.mxu0 0
    %643 = vmatpush1.bf16.msra.mxu0 %v620
    %644 = vmatprep.subr.bf16.mxu0 0
    %645 = vmatpush1.bf16.msra.mxu0 %v621
    %646 = vmatprep.subr.bf16.mxu0 0
    %647 = vmatpush1.bf16.msra.mxu0 0
    %648 = vmatprep.subr.bf16.mxu0 0
    %649 = vmatpush1.bf16.msra.mxu0 0
    %650 = vmatprep.subr.bf16.mxu0 0
    %651 = vmatpush1.bf16.msra.mxu0 0
    %652 = vmatprep.subr.bf16.mxu0 0
    %653 = vmatpush1.bf16.msra.mxu0 0
    %654 = vmatprep.subr.bf16.mxu0 0
    %655 = vmatpush1.bf16.msra.mxu0 0
    %656 = vmatprep.subr.bf16.mxu0 0
    %657 = vmatpush1.bf16.msra.mxu0 0
    %658 = vmatprep.subr.bf16.mxu0 0
    %659 = vmatpush1.bf16.msra.mxu0 0
    %660 = vmatprep.subr.bf16.mxu0 0
    %661 = vmatpush1.bf16.msra.mxu0 0
    %662 = vmatprep.mubr.bf16.mxu0 0
    %663 = vmatmul.mubr.bf16.gmra.mrb[0].mxu0 %v284
    %v664 = vpop.f32.mrb[0].mxu0
    %v665 = vadd.f32 %v520, %v664
    %v666 = vpop.f32.mrb[0].mxu0
    %v667 = vpop.f32.mrb[0].mxu0
    %v668 = vadd.f32 %v523, %v667
    %v669 = vpop.f32.mrb[0].mxu0
    %670 = vmatprep.mubr.bf16.mxu0 0
    %671 = vmatmul.mubr.bf16.gmra.mrb[0].mxu0 %v285
    %v672 = vpop.f32.mrb[0].mxu0
    %v673 = vadd.f32 %v528, %v672
    %v674 = vpop.f32.mrb[0].mxu0
    %v675 = vpop.f32.mrb[0].mxu0
    %v676 = vadd.f32 %v531, %v675
    %v677 = vpop.f32.mrb[0].mxu0
    %678 = vmatprep.mubr.bf16.mxu0 0
    %679 = vmatmul.mubr.bf16.gmra.mrb[0].mxu0 %v286
    %v680 = vpop.f32.mrb[0].mxu0
    %v681 = vadd.f32 %v536, %v680
    %v682 = vpop.f32.mrb[0].mxu0
    %v683 = vpop.f32.mrb[0].mxu0
    %v684 = vadd.f32 %v539, %v683
    %v685 = vpop.f32.mrb[0].mxu0
    %686 = vmatprep.mubr.bf16.mxu0 0
    %687 = vmatmul.mubr.bf16.gmra.mrb[0].mxu0 %v287
    %v688 = vpop.f32.mrb[0].mxu0
    %v689 = vadd.f32 %v544, %v688
    %v690 = vpop.f32.mrb[0].mxu0
    %v691 = vpop.f32.mrb[0].mxu0
    %v692 = vadd.f32 %v547, %v691
    %v693 = vpop.f32.mrb[0].mxu0
    %694 = vmatprep.mubr.bf16.mxu0 0
    %695 = vmatmul.mubr.bf16.gmra.mrb[0].mxu0 %v288
    %v696 = vpop.f32.mrb[0].mxu0
    %v697 = vadd.f32 %v552, %v696
    %v698 = vpop.f32.mrb[0].mxu0
    %v699 = vpop.f32.mrb[0].mxu0
    %v700 = vadd.f32 %v555, %v699
    %v701 = vpop.f32.mrb[0].mxu0
    %702 = vmatprep.mubr.bf16.mxu0 0
    %703 = vmatmul.mubr.bf16.gmra.mrb[0].mxu0 %v289
    %v704 = vpop.f32.mrb[0].mxu0
    %v705 = vadd.f32 %v560, %v704
    %v706 = vpop.f32.mrb[0].mxu0
    %v707 = vpop.f32.mrb[0].mxu0
    %v708 = vadd.f32 %v563, %v707
    %v709 = vpop.f32.mrb[0].mxu0
    %710 = vmatprep.mubr.bf16.mxu0 0
    %711 = vmatmul.mubr.bf16.gmra.mrb[0].mxu0 %v290
    %v712 = vpop.f32.mrb[0].mxu0
    %v713 = vadd.f32 %v568, %v712
    %v714 = vpop.f32.mrb[0].mxu0
    %v715 = vpop.f32.mrb[0].mxu0
    %v716 = vadd.f32 %v571, %v715
    %v717 = vpop.f32.mrb[0].mxu0
    %718 = vmatprep.mubr.bf16.mxu0 0
    %719 = vmatmul.mubr.bf16.gmra.mrb[0].mxu0 %v291
    %v720 = vpop.f32.mrb[0].mxu0
    %v721 = vadd.f32 %v576, %v720
    %v722 = vpop.f32.mrb[0].mxu0
    %v723 = vpop.f32.mrb[0].mxu0
    %v724 = vadd.f32 %v579, %v723
    %v725 = vpop.f32.mrb[0].mxu0
    %726 = vdwg.mxu0
    %v727 = vld [vmem:[#allocation10] sm:$0x1]
    %v729 = vlaneseq
    %v730 = vshrl.u32 %v729, 7
    %v731 = vsub.s32 0, %v730
    %v732 = vrot.slane %v727, %v731
    %v734 = vadd.f32 %v665, %v732
    %v735 = vadd.f32 %v668, %v732
    %v736 = vadd.f32 %v673, %v732
    %v737 = vadd.f32 %v676, %v732
    %v738 = vadd.f32 %v681, %v732
    %v739 = vadd.f32 %v684, %v732
    %v740 = vadd.f32 %v689, %v732
    %v741 = vadd.f32 %v692, %v732
    %v742 = vadd.f32 %v697, %v732
    %v743 = vadd.f32 %v700, %v732
    %v744 = vadd.f32 %v705, %v732
    %v745 = vadd.f32 %v708, %v732
    %v746 = vadd.f32 %v713, %v732
    %v747 = vadd.f32 %v716, %v732
    %v748 = vadd.f32 %v721, %v732
    %v749 = vadd.f32 %v724, %v732
    %v750 = vmax.f32 %v734, 0.0
    %v751 = vmax.f32 %v735, 0.0
    %v752 = vmax.f32 %v736, 0.0
    %v753 = vmax.f32 %v737, 0.0
    %v754 = vmax.f32 %v738, 0.0
    %v755 = vmax.f32 %v739, 0.0
    %v756 = vmax.f32 %v740, 0.0
    %v757 = vmax.f32 %v741, 0.0
    %v758 = vmax.f32 %v742, 0.0
    %v759 = vmax.f32 %v743, 0.0
    %v760 = vmax.f32 %v744, 0.0
    %v761 = vmax.f32 %v745, 0.0
    %v762 = vmax.f32 %v746, 0.0
    %v763 = vmax.f32 %v747, 0.0
    %v764 = vmax.f32 %v748, 0.0
    %v765 = vmax.f32 %v749, 0.0
    %v766 = vpack.c.bf16 %v751, %v750
    %v767 = vpack.c.bf16 %v753, %v752
    %v768 = vpack.c.bf16 %v755, %v754
    %v769 = vpack.c.bf16 %v757, %v756
    %v770 = vpack.c.bf16 %v759, %v758
    %v771 = vpack.c.bf16 %v761, %v760
    %v772 = vpack.c.bf16 %v763, %v762
    %v773 = vpack.c.bf16 %v765, %v764
    %774 = vmatprep.subr.bf16.mxu0 0
    %775 = vmatpush1.bf16.msra.mxu0 %v766
    %776 = vmatprep.subr.bf16.mxu0 0
    %777 = vmatpush1.bf16.msra.mxu0 %v767
    %778 = vmatprep.subr.bf16.mxu0 0
    %779 = vmatpush1.bf16.msra.mxu0 %v768
    %780 = vmatprep.subr.bf16.mxu0 0
    %781 = vmatpush1.bf16.msra.mxu0 %v769
    %782 = vmatprep.subr.bf16.mxu0 0
    %783 = vmatpush1.bf16.msra.mxu0 %v770
    %784 = vmatprep.subr.bf16.mxu0 0
    %785 = vmatpush1.bf16.msra.mxu0 %v771
    %786 = vmatprep.subr.bf16.mxu0 0
    %787 = vmatpush1.bf16.msra.mxu0 %v772
    %788 = vmatprep.subr.bf16.mxu0 0
    %789 = vmatpush1.bf16.msra.mxu0 %v773
    %790 = vmatprep.subr.bf16.mxu0 0
    %791 = vmatpush1.bf16.msra.mxu0 0
    %792 = vmatprep.subr.bf16.mxu0 0
    %793 = vmatpush1.bf16.msra.mxu0 0
    %794 = vmatprep.subr.bf16.mxu0 0
    %795 = vmatpush1.bf16.msra.mxu0 0
    %796 = vmatprep.subr.bf16.mxu0 0
    %797 = vmatpush1.bf16.msra.mxu0 0
    %798 = vmatprep.subr.bf16.mxu0 0
    %799 = vmatpush1.bf16.msra.mxu0 0
    %800 = vmatprep.subr.bf16.mxu0 0
    %801 = vmatpush1.bf16.msra.mxu0 0
    %802 = vmatprep.subr.bf16.mxu0 0
    %803 = vmatpush1.bf16.msra.mxu0 0
    %804 = vmatprep.subr.bf16.mxu0 0
    %805 = vmatpush1.bf16.msra.mxu0 0
    %806 = vmatprep.mubr.bf16.mxu0 0
    %807 = vmatmul.mubr.bf16.gmra.mrb[0].mxu0 %v236
    %v808 = vpop.f32.mrb[0].mxu0
    %v809 = vadd.f32 0.0, %v808
    %v810 = vpop.f32.mrb[0].mxu0
    %v811 = vpop.f32.mrb[0].mxu0
    %v812 = vadd.f32 0.0, %v811
    %v813 = vpop.f32.mrb[0].mxu0
    %814 = vmatprep.mubr.bf16.mxu0 0
    %815 = vmatmul.mubr.bf16.gmra.mrb[0].mxu0 %v237
    %v816 = vpop.f32.mrb[0].mxu0
    %v817 = vadd.f32 0.0, %v816
    %v818 = vpop.f32.mrb[0].mxu0
    %v819 = vpop.f32.mrb[0].mxu0
    %v820 = vadd.f32 0.0, %v819
    %v821 = vpop.f32.mrb[0].mxu0
    %822 = vmatprep.mubr.bf16.mxu0 0
    %823 = vmatmul.mubr.bf16.gmra.mrb[0].mxu0 %v238
    %v824 = vpop.f32.mrb[0].mxu0
    %v825 = vadd.f32 0.0, %v824
    %v826 = vpop.f32.mrb[0].mxu0
    %v827 = vpop.f32.mrb[0].mxu0
    %v828 = vadd.f32 0.0, %v827
    %v829 = vpop.f32.mrb[0].mxu0
    %830 = vmatprep.mubr.bf16.mxu0 0
    %831 = vmatmul.mubr.bf16.gmra.mrb[0].mxu0 %v239
    %v832 = vpop.f32.mrb[0].mxu0
    %v833 = vadd.f32 0.0, %v832
    %v834 = vpop.f32.mrb[0].mxu0
    %v835 = vpop.f32.mrb[0].mxu0
    %v836 = vadd.f32 0.0, %v835
    %v837 = vpop.f32.mrb[0].mxu0
    %838 = vmatprep.mubr.bf16.mxu0 0
    %839 = vmatmul.mubr.bf16.gmra.mrb[0].mxu0 %v240
    %v840 = vpop.f32.mrb[0].mxu0
    %v841 = vadd.f32 0.0, %v840
    %v842 = vpop.f32.mrb[0].mxu0
    %v843 = vpop.f32.mrb[0].mxu0
    %v844 = vadd.f32 0.0, %v843
    %v845 = vpop.f32.mrb[0].mxu0
    %846 = vmatprep.mubr.bf16.mxu0 0
    %847 = vmatmul.mubr.bf16.gmra.mrb[0].mxu0 %v241
    %v848 = vpop.f32.mrb[0].mxu0
    %v849 = vadd.f32 0.0, %v848
    %v850 = vpop.f32.mrb[0].mxu0
    %v851 = vpop.f32.mrb[0].mxu0
    %v852 = vadd.f32 0.0, %v851
    %v853 = vpop.f32.mrb[0].mxu0
    %854 = vmatprep.mubr.bf16.mxu0 0
    %855 = vmatmul.mubr.bf16.gmra.mrb[0].mxu0 %v242
    %v856 = vpop.f32.mrb[0].mxu0
    %v857 = vadd.f32 0.0, %v856
    %v858 = vpop.f32.mrb[0].mxu0
    %v859 = vpop.f32.mrb[0].mxu0
    %v860 = vadd.f32 0.0, %v859
    %v861 = vpop.f32.mrb[0].mxu0
    %862 = vmatprep.mubr.bf16.mxu0 0
    %863 = vmatmul.mubr.bf16.gmra.mrb[0].mxu0 %v243
    %v864 = vpop.f32.mrb[0].mxu0
    %v865 = vadd.f32 0.0, %v864
    %v866 = vpop.f32.mrb[0].mxu0
    %v867 = vpop.f32.mrb[0].mxu0
    %v868 = vadd.f32 0.0, %v867
    %v869 = vpop.f32.mrb[0].mxu0
    %870 = vdwg.mxu0
    %v871 = vld [vmem:[#allocation11] sm:$0xf]
    %v872 = vld [vmem:[#allocation11 + $0x4] sm:$0xf]
    %v873 = vld [vmem:[#allocation11 + $0x8] sm:$0xf]
    %v874 = vld [vmem:[#allocation11 + $0xc] sm:$0xf]
    %v875 = vld [vmem:[#allocation11 + $0x10] sm:$0xf]
    %v876 = vld [vmem:[#allocation11 + $0x14] sm:$0xf]
    %v877 = vld [vmem:[#allocation11 + $0x18] sm:$0xf]
    %v878 = vld [vmem:[#allocation11 + $0x1c] sm:$0xf]
    %v879 = vld [vmem:[#allocation11 + $0x20] sm:$0xf]
    %v880 = vld [vmem:[#allocation11 + $0x24] sm:$0xf]
    %v881 = vld [vmem:[#allocation11 + $0x28] sm:$0xf]
    %v882 = vld [vmem:[#allocation11 + $0x2c] sm:$0xf]
    %v883 = vld [vmem:[#allocation11 + $0x30] sm:$0xf]
    %v884 = vld [vmem:[#allocation11 + $0x34] sm:$0xf]
    %v885 = vld [vmem:[#allocation11 + $0x38] sm:$0xf]
    %v886 = vld [vmem:[#allocation11 + $0x3c] sm:$0xf]
    %v887 = vpack.c.bf16 %v812, %v809
    %v888 = vpack.c.bf16 %v820, %v817
    %v889 = vpack.c.bf16 %v828, %v825
    %v890 = vpack.c.bf16 %v836, %v833
    %v891 = vpack.c.bf16 %v844, %v841
    %v892 = vpack.c.bf16 %v852, %v849
    %v893 = vpack.c.bf16 %v860, %v857
    %v894 = vpack.c.bf16 %v868, %v865
    %v895 = vld [vmem:[#allocation13] sm:$0xf]
    %v896 = vld [vmem:[#allocation13 + $0x4] sm:$0xf]
    %v897 = vld [vmem:[#allocation13 + $0x8] sm:$0xf]
    %v898 = vld [vmem:[#allocation13 + $0xc] sm:$0xf]
    %v899 = vld [vmem:[#allocation13 + $0x10] sm:$0xf]
    %v900 = vld [vmem:[#allocation13 + $0x14] sm:$0xf]
    %v901 = vld [vmem:[#allocation13 + $0x18] sm:$0xf]
    %v902 = vld [vmem:[#allocation13 + $0x1c] sm:$0xf]
    %v903 = vld [vmem:[#allocation13 + $0x20] sm:$0xf]
    %v904 = vld [vmem:[#allocation13 + $0x24] sm:$0xf]
    %v905 = vld [vmem:[#allocation13 + $0x28] sm:$0xf]
    %v906 = vld [vmem:[#allocation13 + $0x2c] sm:$0xf]
    %v907 = vld [vmem:[#allocation13 + $0x30] sm:$0xf]
    %v908 = vld [vmem:[#allocation13 + $0x34] sm:$0xf]
    %v909 = vld [vmem:[#allocation13 + $0x38] sm:$0xf]
    %v910 = vld [vmem:[#allocation13 + $0x3c] sm:$0xf]
    %v927 = vunpack.c.l.b16 %v895
    %v928 = vunpack.c.l.b16 %v896
    %v929 = vunpack.c.l.b16 %v897
    %v930 = vunpack.c.l.b16 %v898
    %v931 = vunpack.c.l.b16 %v899
    %v932 = vunpack.c.l.b16 %v900
    %v933 = vunpack.c.l.b16 %v901
    %v934 = vunpack.c.l.b16 %v902
    %v935 = vunpack.c.l.b16 %v903
    %v936 = vunpack.c.l.b16 %v904
    %v937 = vunpack.c.l.b16 %v905
    %v938 = vunpack.c.l.b16 %v906
    %v939 = vunpack.c.l.b16 %v907
    %v940 = vunpack.c.l.b16 %v908
    %v941 = vunpack.c.l.b16 %v909
    %v942 = vunpack.c.l.b16 %v910
    %v943 = vpack.c.b16 %v928, %v927
    %v944 = vpack.c.b16 %v930, %v929
    %v945 = vpack.c.b16 %v932, %v931
    %v946 = vpack.c.b16 %v934, %v933
    %v947 = vpack.c.b16 %v936, %v935
    %v948 = vpack.c.b16 %v938, %v937
    %v949 = vpack.c.b16 %v940, %v939
    %v950 = vpack.c.b16 %v942, %v941
    %959 = vmatprep.subr.bf16.mxu0 0
    %960 = vmatpush1.bf16.msra.mxu0 %v943
    %961 = vmatprep.subr.bf16.mxu0 0
    %962 = vmatpush1.bf16.msra.mxu0 %v944
    %963 = vmatprep.subr.bf16.mxu0 0
    %964 = vmatpush1.bf16.msra.mxu0 %v945
    %965 = vmatprep.subr.bf16.mxu0 0
    %966 = vmatpush1.bf16.msra.mxu0 %v946
    %967 = vmatprep.subr.bf16.mxu0 0
    %968 = vmatpush1.bf16.msra.mxu0 %v947
    %969 = vmatprep.subr.bf16.mxu0 0
    %970 = vmatpush1.bf16.msra.mxu0 %v948
    %971 = vmatprep.subr.bf16.mxu0 0
    %972 = vmatpush1.bf16.msra.mxu0 %v949
    %973 = vmatprep.subr.bf16.mxu0 0
    %974 = vmatpush1.bf16.msra.mxu0 %v950
    %975 = vmatprep.subr.bf16.mxu0 0
    %976 = vmatpush1.bf16.msra.mxu0 0
    %977 = vmatprep.subr.bf16.mxu0 0
    %978 = vmatpush1.bf16.msra.mxu0 0
    %979 = vmatprep.subr.bf16.mxu0 0
    %980 = vmatpush1.bf16.msra.mxu0 0
    %981 = vmatprep.subr.bf16.mxu0 0
    %982 = vmatpush1.bf16.msra.mxu0 0
    %983 = vmatprep.subr.bf16.mxu0 0
    %984 = vmatpush1.bf16.msra.mxu0 0
    %985 = vmatprep.subr.bf16.mxu0 0
    %986 = vmatpush1.bf16.msra.mxu0 0
    %987 = vmatprep.subr.bf16.mxu0 0
    %988 = vmatpush1.bf16.msra.mxu0 0
    %989 = vmatprep.subr.bf16.mxu0 0
    %990 = vmatpush1.bf16.msra.mxu0 0
    %991 = vmatprep.mubr.bf16.mxu0 0
    %992 = vmatmul.mubr.bf16.gmra.mrb[0].mxu0 %v887
    %v993 = vpop.f32.mrb[0].mxu0
    %v994 = vadd.f32 0.0, %v993
    %v995 = vpop.f32.mrb[0].mxu0
    %v996 = vpop.f32.mrb[0].mxu0
    %v997 = vadd.f32 0.0, %v996
    %v998 = vpop.f32.mrb[0].mxu0
    %999 = vmatprep.mubr.bf16.mxu0 0
    %1000 = vmatmul.mubr.bf16.gmra.mrb[0].mxu0 %v888
    %v1001 = vpop.f32.mrb[0].mxu0
    %v1002 = vadd.f32 0.0, %v1001
    %v1003 = vpop.f32.mrb[0].mxu0
    %v1004 = vpop.f32.mrb[0].mxu0
    %v1005 = vadd.f32 0.0, %v1004
    %v1006 = vpop.f32.mrb[0].mxu0
    %1007 = vmatprep.mubr.bf16.mxu0 0
    %1008 = vmatmul.mubr.bf16.gmra.mrb[0].mxu0 %v889
    %v1009 = vpop.f32.mrb[0].mxu0
    %v1010 = vadd.f32 0.0, %v1009
    %v1011 = vpop.f32.mrb[0].mxu0
    %v1012 = vpop.f32.mrb[0].mxu0
    %v1013 = vadd.f32 0.0, %v1012
    %v1014 = vpop.f32.mrb[0].mxu0
    %1015 = vmatprep.mubr.bf16.mxu0 0
    %1016 = vmatmul.mubr.bf16.gmra.mrb[0].mxu0 %v890
    %v1017 = vpop.f32.mrb[0].mxu0
    %v1018 = vadd.f32 0.0, %v1017
    %v1019 = vpop.f32.mrb[0].mxu0
    %v1020 = vpop.f32.mrb[0].mxu0
    %v1021 = vadd.f32 0.0, %v1020
    %v1022 = vpop.f32.mrb[0].mxu0
    %1023 = vmatprep.mubr.bf16.mxu0 0
    %1024 = vmatmul.mubr.bf16.gmra.mrb[0].mxu0 %v891
    %v1025 = vpop.f32.mrb[0].mxu0
    %v1026 = vadd.f32 0.0, %v1025
    %v1027 = vpop.f32.mrb[0].mxu0
    %v1028 = vpop.f32.mrb[0].mxu0
    %v1029 = vadd.f32 0.0, %v1028
    %v1030 = vpop.f32.mrb[0].mxu0
    %1031 = vmatprep.mubr.bf16.mxu0 0
    %1032 = vmatmul.mubr.bf16.gmra.mrb[0].mxu0 %v892
    %v1033 = vpop.f32.mrb[0].mxu0
    %v1034 = vadd.f32 0.0, %v1033
    %v1035 = vpop.f32.mrb[0].mxu0
    %v1036 = vpop.f32.mrb[0].mxu0
    %v1037 = vadd.f32 0.0, %v1036
    %v1038 = vpop.f32.mrb[0].mxu0
    %1039 = vmatprep.mubr.bf16.mxu0 0
    %1040 = vmatmul.mubr.bf16.gmra.mrb[0].mxu0 %v893
    %v1041 = vpop.f32.mrb[0].mxu0
    %v1042 = vadd.f32 0.0, %v1041
    %v1043 = vpop.f32.mrb[0].mxu0
    %v1044 = vpop.f32.mrb[0].mxu0
    %v1045 = vadd.f32 0.0, %v1044
    %v1046 = vpop.f32.mrb[0].mxu0
    %1047 = vmatprep.mubr.bf16.mxu0 0
    %1048 = vmatmul.mubr.bf16.gmra.mrb[0].mxu0 %v894
    %v1049 = vpop.f32.mrb[0].mxu0
    %v1050 = vadd.f32 0.0, %v1049
    %v1051 = vpop.f32.mrb[0].mxu0
    %v1052 = vpop.f32.mrb[0].mxu0
    %v1053 = vadd.f32 0.0, %v1052
    %v1054 = vpop.f32.mrb[0].mxu0
    %1055 = vdwg.mxu0
    %v1072 = vunpack.c.l.b16 %v871
    %v1073 = vunpack.c.l.b16 %v872
    %v1074 = vunpack.c.l.b16 %v873
    %v1075 = vunpack.c.l.b16 %v874
    %v1076 = vunpack.c.l.b16 %v875
    %v1077 = vunpack.c.l.b16 %v876
    %v1078 = vunpack.c.l.b16 %v877
    %v1079 = vunpack.c.l.b16 %v878
    %v1080 = vunpack.c.l.b16 %v879
    %v1081 = vunpack.c.l.b16 %v880
    %v1082 = vunpack.c.l.b16 %v881
    %v1083 = vunpack.c.l.b16 %v882
    %v1084 = vunpack.c.l.b16 %v883
    %v1085 = vunpack.c.l.b16 %v884
    %v1086 = vunpack.c.l.b16 %v885
    %v1087 = vunpack.c.l.b16 %v886
    %v1088 = vpack.c.b16 %v1073, %v1072
    %v1089 = vpack.c.b16 %v1075, %v1074
    %v1090 = vpack.c.b16 %v1077, %v1076
    %v1091 = vpack.c.b16 %v1079, %v1078
    %v1092 = vpack.c.b16 %v1081, %v1080
    %v1093 = vpack.c.b16 %v1083, %v1082
    %v1094 = vpack.c.b16 %v1085, %v1084
    %v1095 = vpack.c.b16 %v1087, %v1086
    %1104 = vmatprep.subr.bf16.mxu0 0
    %1105 = vmatpush1.bf16.msra.mxu0 %v1088
    %1106 = vmatprep.subr.bf16.mxu0 0
    %1107 = vmatpush1.bf16.msra.mxu0 %v1089
    %1108 = vmatprep.subr.bf16.mxu0 0
    %1109 = vmatpush1.bf16.msra.mxu0 %v1090
    %1110 = vmatprep.subr.bf16.mxu0 0
    %1111 = vmatpush1.bf16.msra.mxu0 %v1091
    %1112 = vmatprep.subr.bf16.mxu0 0
    %1113 = vmatpush1.bf16.msra.mxu0 %v1092
    %1114 = vmatprep.subr.bf16.mxu0 0
    %1115 = vmatpush1.bf16.msra.mxu0 %v1093
    %1116 = vmatprep.subr.bf16.mxu0 0
    %1117 = vmatpush1.bf16.msra.mxu0 %v1094
    %1118 = vmatprep.subr.bf16.mxu0 0
    %1119 = vmatpush1.bf16.msra.mxu0 %v1095
    %1120 = vmatprep.subr.bf16.mxu0 0
    %1121 = vmatpush1.bf16.msra.mxu0 0
    %1122 = vmatprep.subr.bf16.mxu0 0
    %1123 = vmatpush1.bf16.msra.mxu0 0
    %1124 = vmatprep.subr.bf16.mxu0 0
    %1125 = vmatpush1.bf16.msra.mxu0 0
    %1126 = vmatprep.subr.bf16.mxu0 0
    %1127 = vmatpush1.bf16.msra.mxu0 0
    %1128 = vmatprep.subr.bf16.mxu0 0
    %1129 = vmatpush1.bf16.msra.mxu0 0
    %1130 = vmatprep.subr.bf16.mxu0 0
    %1131 = vmatpush1.bf16.msra.mxu0 0
    %1132 = vmatprep.subr.bf16.mxu0 0
    %1133 = vmatpush1.bf16.msra.mxu0 0
    %1134 = vmatprep.subr.bf16.mxu0 0
    %1135 = vmatpush1.bf16.msra.mxu0 0
    %1136 = vmatprep.mubr.bf16.mxu0 0
    %1137 = vmatmul.mubr.bf16.gmra.mrb[0].mxu0 %v766
    %v1138 = vpop.f32.mrb[0].mxu0
    %v1139 = vadd.f32 %v994, %v1138
    %v1140 = vpop.f32.mrb[0].mxu0
    %v1141 = vpop.f32.mrb[0].mxu0
    %v1142 = vadd.f32 %v997, %v1141
    %v1143 = vpop.f32.mrb[0].mxu0
    %1144 = vmatprep.mubr.bf16.mxu0 0
    %1145 = vmatmul.mubr.bf16.gmra.mrb[0].mxu0 %v767
    %v1146 = vpop.f32.mrb[0].mxu0
    %v1147 = vadd.f32 %v1002, %v1146
    %v1148 = vpop.f32.mrb[0].mxu0
    %v1149 = vpop.f32.mrb[0].mxu0
    %v1150 = vadd.f32 %v1005, %v1149
    %v1151 = vpop.f32.mrb[0].mxu0
    %1152 = vmatprep.mubr.bf16.mxu0 0
    %1153 = vmatmul.mubr.bf16.gmra.mrb[0].mxu0 %v768
    %v1154 = vpop.f32.mrb[0].mxu0
    %v1155 = vadd.f32 %v1010, %v1154
    %v1156 = vpop.f32.mrb[0].mxu0
    %v1157 = vpop.f32.mrb[0].mxu0
    %v1158 = vadd.f32 %v1013, %v1157
    %v1159 = vpop.f32.mrb[0].mxu0
    %1160 = vmatprep.mubr.bf16.mxu0 0
    %1161 = vmatmul.mubr.bf16.gmra.mrb[0].mxu0 %v769
    %v1162 = vpop.f32.mrb[0].mxu0
    %v1163 = vadd.f32 %v1018, %v1162
    %v1164 = vpop.f32.mrb[0].mxu0
    %v1165 = vpop.f32.mrb[0].mxu0
    %v1166 = vadd.f32 %v1021, %v1165
    %v1167 = vpop.f32.mrb[0].mxu0
    %1168 = vmatprep.mubr.bf16.mxu0 0
    %1169 = vmatmul.mubr.bf16.gmra.mrb[0].mxu0 %v770
    %v1170 = vpop.f32.mrb[0].mxu0
    %v1171 = vadd.f32 %v1026, %v1170
    %v1172 = vpop.f32.mrb[0].mxu0
    %v1173 = vpop.f32.mrb[0].mxu0
    %v1174 = vadd.f32 %v1029, %v1173
    %v1175 = vpop.f32.mrb[0].mxu0
    %1176 = vmatprep.mubr.bf16.mxu0 0
    %1177 = vmatmul.mubr.bf16.gmra.mrb[0].mxu0 %v771
    %v1178 = vpop.f32.mrb[0].mxu0
    %v1179 = vadd.f32 %v1034, %v1178
    %v1180 = vpop.f32.mrb[0].mxu0
    %v1181 = vpop.f32.mrb[0].mxu0
    %v1182 = vadd.f32 %v1037, %v1181
    %v1183 = vpop.f32.mrb[0].mxu0
    %1184 = vmatprep.mubr.bf16.mxu0 0
    %1185 = vmatmul.mubr.bf16.gmra.mrb[0].mxu0 %v772
    %v1186 = vpop.f32.mrb[0].mxu0
    %v1187 = vadd.f32 %v1042, %v1186
    %v1188 = vpop.f32.mrb[0].mxu0
    %v1189 = vpop.f32.mrb[0].mxu0
    %v1190 = vadd.f32 %v1045, %v1189
    %v1191 = vpop.f32.mrb[0].mxu0
    %1192 = vmatprep.mubr.bf16.mxu0 0
    %1193 = vmatmul.mubr.bf16.gmra.mrb[0].mxu0 %v773
    %v1194 = vpop.f32.mrb[0].mxu0
    %v1195 = vadd.f32 %v1050, %v1194
    %v1196 = vpop.f32.mrb[0].mxu0
    %v1197 = vpop.f32.mrb[0].mxu0
    %v1198 = vadd.f32 %v1053, %v1197
    %v1199 = vpop.f32.mrb[0].mxu0
    %1200 = vdwg.mxu0
    %v1201 = vld [vmem:[#allocation14] sm:$0x1]
    %v1203 = vlaneseq
    %v1204 = vshrl.u32 %v1203, 7
    %v1205 = vsub.s32 0, %v1204
    %v1206 = vrot.slane %v1201, %v1205
    %v1208 = vadd.f32 %v1139, %v1206
    %v1209 = vadd.f32 %v1142, %v1206
    %v1210 = vadd.f32 %v1147, %v1206
    %v1211 = vadd.f32 %v1150, %v1206
    %v1212 = vadd.f32 %v1155, %v1206
    %v1213 = vadd.f32 %v1158, %v1206
    %v1214 = vadd.f32 %v1163, %v1206
    %v1215 = vadd.f32 %v1166, %v1206
    %v1216 = vadd.f32 %v1171, %v1206
    %v1217 = vadd.f32 %v1174, %v1206
    %v1218 = vadd.f32 %v1179, %v1206
    %v1219 = vadd.f32 %v1182, %v1206
    %v1220 = vadd.f32 %v1187, %v1206
    %v1221 = vadd.f32 %v1190, %v1206
    %v1222 = vadd.f32 %v1195, %v1206
    %v1223 = vadd.f32 %v1198, %v1206
    %1224 = vst [vmem:[#allocation19] sm:$0xff] %v1208
    %1225 = vst [vmem:[#allocation19 + $0x8] sm:$0xff] %v1209
    %1226 = vst [vmem:[#allocation19 + $0x10] sm:$0xff] %v1210
    %1227 = vst [vmem:[#allocation19 + $0x18] sm:$0xff] %v1211
    %1228 = vst [vmem:[#allocation19 + $0x20] sm:$0xff] %v1212
    %1229 = vst [vmem:[#allocation19 + $0x28] sm:$0xff] %v1213
    %1230 = vst [vmem:[#allocation19 + $0x30] sm:$0xff] %v1214
    %1231 = vst [vmem:[#allocation19 + $0x38] sm:$0xff] %v1215
    %1232 = vst [vmem:[#allocation19 + $0x40] sm:$0xff] %v1216
    %1233 = vst [vmem:[#allocation19 + $0x48] sm:$0xff] %v1217
    %1234 = vst [vmem:[#allocation19 + $0x50] sm:$0xff] %v1218
    %1235 = vst [vmem:[#allocation19 + $0x58] sm:$0xff] %v1219
    %1236 = vst [vmem:[#allocation19 + $0x60] sm:$0xff] %v1220
    %1237 = vst [vmem:[#allocation19 + $0x68] sm:$0xff] %v1221
    %1238 = vst [vmem:[#allocation19 + $0x70] sm:$0xff] %v1222
    %1239 = vst [vmem:[#allocation19 + $0x78] sm:$0xff] %v1223
    %v1240 = vpack.c.bf16 %v1209, %v1208
    %v1241 = vpack.c.bf16 %v1211, %v1210
    %v1242 = vpack.c.bf16 %v1213, %v1212
    %v1243 = vpack.c.bf16 %v1215, %v1214
    %v1244 = vpack.c.bf16 %v1217, %v1216
    %v1245 = vpack.c.bf16 %v1219, %v1218
    %v1246 = vpack.c.bf16 %v1221, %v1220
    %v1247 = vpack.c.bf16 %v1223, %v1222
    %v1248 = vld [vmem:[#allocation16] sm:$0xf]
    %v1249 = vld [vmem:[#allocation16 + $0x4] sm:$0xf]
    %v1250 = vld [vmem:[#allocation16 + $0x8] sm:$0xf]
    %v1251 = vld [vmem:[#allocation16 + $0xc] sm:$0xf]
    %v1252 = vld [vmem:[#allocation16 + $0x10] sm:$0xf]
    %v1253 = vld [vmem:[#allocation16 + $0x14] sm:$0xf]
    %v1254 = vld [vmem:[#allocation16 + $0x18] sm:$0xf]
    %v1255 = vld [vmem:[#allocation16 + $0x1c] sm:$0xf]
    %v1256 = vld [vmem:[#allocation16 + $0x20] sm:$0xf]
    %v1257 = vld [vmem:[#allocation16 + $0x24] sm:$0xf]
    %v1258 = vld [vmem:[#allocation16 + $0x28] sm:$0xf]
    %v1259 = vld [vmem:[#allocation16 + $0x2c] sm:$0xf]
    %v1260 = vld [vmem:[#allocation16 + $0x30] sm:$0xf]
    %v1261 = vld [vmem:[#allocation16 + $0x34] sm:$0xf]
    %v1262 = vld [vmem:[#allocation16 + $0x38] sm:$0xf]
    %v1263 = vld [vmem:[#allocation16 + $0x3c] sm:$0xf]
    %v1280 = vunpack.c.l.b16 %v1248
    %v1281 = vunpack.c.l.b16 %v1249
    %v1282 = vunpack.c.l.b16 %v1250
    %v1283 = vunpack.c.l.b16 %v1251
    %v1284 = vunpack.c.l.b16 %v1252
    %v1285 = vunpack.c.l.b16 %v1253
    %v1286 = vunpack.c.l.b16 %v1254
    %v1287 = vunpack.c.l.b16 %v1255
    %v1288 = vunpack.c.l.b16 %v1256
    %v1289 = vunpack.c.l.b16 %v1257
    %v1290 = vunpack.c.l.b16 %v1258
    %v1291 = vunpack.c.l.b16 %v1259
    %v1292 = vunpack.c.l.b16 %v1260
    %v1293 = vunpack.c.l.b16 %v1261
    %v1294 = vunpack.c.l.b16 %v1262
    %v1295 = vunpack.c.l.b16 %v1263
    %v1296 = vpack.c.b16 %v1281, %v1280
    %v1297 = vpack.c.b16 %v1283, %v1282
    %v1298 = vpack.c.b16 %v1285, %v1284
    %v1299 = vpack.c.b16 %v1287, %v1286
    %v1300 = vpack.c.b16 %v1289, %v1288
    %v1301 = vpack.c.b16 %v1291, %v1290
    %v1302 = vpack.c.b16 %v1293, %v1292
    %v1303 = vpack.c.b16 %v1295, %v1294
    %1312 = vmatprep.subr.bf16.mxu0 0
    %1313 = vmatpush1.bf16.msra.mxu0 %v1240
    %1314 = vmatprep.subr.bf16.mxu0 0
    %1315 = vmatpush1.bf16.msra.mxu0 %v1241
    %1316 = vmatprep.subr.bf16.mxu0 0
    %1317 = vmatpush1.bf16.msra.mxu0 %v1242
    %1318 = vmatprep.subr.bf16.mxu0 0
    %1319 = vmatpush1.bf16.msra.mxu0 %v1243
    %1320 = vmatprep.subr.bf16.mxu0 0
    %1321 = vmatpush1.bf16.msra.mxu0 %v1244
    %1322 = vmatprep.subr.bf16.mxu0 0
    %1323 = vmatpush1.bf16.msra.mxu0 %v1245
    %1324 = vmatprep.subr.bf16.mxu0 0
    %1325 = vmatpush1.bf16.msra.mxu0 %v1246
    %1326 = vmatprep.subr.bf16.mxu0 0
    %1327 = vmatpush1.bf16.msra.mxu0 %v1247
    %1328 = vmatprep.subr.bf16.mxu0 0
    %1329 = vmatpush1.bf16.msra.mxu0 0
    %1330 = vmatprep.subr.bf16.mxu0 0
    %1331 = vmatpush1.bf16.msra.mxu0 0
    %1332 = vmatprep.subr.bf16.mxu0 0
    %1333 = vmatpush1.bf16.msra.mxu0 0
    %1334 = vmatprep.subr.bf16.mxu0 0
    %1335 = vmatpush1.bf16.msra.mxu0 0
    %1336 = vmatprep.subr.bf16.mxu0 0
    %1337 = vmatpush1.bf16.msra.mxu0 0
    %1338 = vmatprep.subr.bf16.mxu0 0
    %1339 = vmatpush1.bf16.msra.mxu0 0
    %1340 = vmatprep.subr.bf16.mxu0 0
    %1341 = vmatpush1.bf16.msra.mxu0 0
    %1342 = vmatprep.subr.bf16.mxu0 0
    %1343 = vmatpush1.bf16.msra.mxu0 0
    %1344 = vmatprep.mubr.bf16.mxu0 0
    %1345 = vmatmul.mubr.bf16.gmra.mrb[0].mxu0 %v1296
    %v1346 = vpop.f32.mrb[0].mxu0
    %v1347 = vadd.f32 0.0, %v1346
    %v1348 = vpop.f32.mrb[0].mxu0
    %v1349 = vpop.f32.mrb[0].mxu0
    %v1350 = vadd.f32 0.0, %v1349
    %v1351 = vpop.f32.mrb[0].mxu0
    %1352 = vmatprep.mubr.bf16.mxu0 0
    %1353 = vmatmul.mubr.bf16.gmra.mrb[0].mxu0 %v1297
    %v1354 = vpop.f32.mrb[0].mxu0
    %v1355 = vadd.f32 0.0, %v1354
    %v1356 = vpop.f32.mrb[0].mxu0
    %v1357 = vpop.f32.mrb[0].mxu0
    %v1358 = vadd.f32 0.0, %v1357
    %v1359 = vpop.f32.mrb[0].mxu0
    %1360 = vmatprep.mubr.bf16.mxu0 0
    %1361 = vmatmul.mubr.bf16.gmra.mrb[0].mxu0 %v1298
    %v1362 = vpop.f32.mrb[0].mxu0
    %v1363 = vadd.f32 0.0, %v1362
    %v1364 = vpop.f32.mrb[0].mxu0
    %v1365 = vpop.f32.mrb[0].mxu0
    %v1366 = vadd.f32 0.0, %v1365
    %v1367 = vpop.f32.mrb[0].mxu0
    %1368 = vmatprep.mubr.bf16.mxu0 0
    %1369 = vmatmul.mubr.bf16.gmra.mrb[0].mxu0 %v1299
    %v1370 = vpop.f32.mrb[0].mxu0
    %v1371 = vadd.f32 0.0, %v1370
    %v1372 = vpop.f32.mrb[0].mxu0
    %v1373 = vpop.f32.mrb[0].mxu0
    %v1374 = vadd.f32 0.0, %v1373
    %v1375 = vpop.f32.mrb[0].mxu0
    %1376 = vmatprep.mubr.bf16.mxu0 0
    %1377 = vmatmul.mubr.bf16.gmra.mrb[0].mxu0 %v1300
    %v1378 = vpop.f32.mrb[0].mxu0
    %v1379 = vadd.f32 0.0, %v1378
    %v1380 = vpop.f32.mrb[0].mxu0
    %v1381 = vpop.f32.mrb[0].mxu0
    %v1382 = vadd.f32 0.0, %v1381
    %v1383 = vpop.f32.mrb[0].mxu0
    %1384 = vmatprep.mubr.bf16.mxu0 0
    %1385 = vmatmul.mubr.bf16.gmra.mrb[0].mxu0 %v1301
    %v1386 = vpop.f32.mrb[0].mxu0
    %v1387 = vadd.f32 0.0, %v1386
    %v1388 = vpop.f32.mrb[0].mxu0
    %v1389 = vpop.f32.mrb[0].mxu0
    %v1390 = vadd.f32 0.0, %v1389
    %v1391 = vpop.f32.mrb[0].mxu0
    %1392 = vmatprep.mubr.bf16.mxu0 0
    %1393 = vmatmul.mubr.bf16.gmra.mrb[0].mxu0 %v1302
    %v1394 = vpop.f32.mrb[0].mxu0
    %v1395 = vadd.f32 0.0, %v1394
    %v1396 = vpop.f32.mrb[0].mxu0
    %v1397 = vpop.f32.mrb[0].mxu0
    %v1398 = vadd.f32 0.0, %v1397
    %v1399 = vpop.f32.mrb[0].mxu0
    %1400 = vmatprep.mubr.bf16.mxu0 0
    %1401 = vmatmul.mubr.bf16.gmra.mrb[0].mxu0 %v1303
    %v1402 = vpop.f32.mrb[0].mxu0
    %v1403 = vadd.f32 0.0, %v1402
    %v1404 = vpop.f32.mrb[0].mxu0
    %v1405 = vpop.f32.mrb[0].mxu0
    %v1406 = vadd.f32 0.0, %v1405
    %v1407 = vpop.f32.mrb[0].mxu0
    %1408 = vdwg.mxu0
    %v1409 = vld [vmem:[#allocation17] sm:$0xf]
    %v1410 = vld [vmem:[#allocation17 + $0x4] sm:$0xf]
    %v1411 = vld [vmem:[#allocation17 + $0x8] sm:$0xf]
    %v1412 = vld [vmem:[#allocation17 + $0xc] sm:$0xf]
    %v1413 = vld [vmem:[#allocation17 + $0x10] sm:$0xf]
    %v1414 = vld [vmem:[#allocation17 + $0x14] sm:$0xf]
    %v1415 = vld [vmem:[#allocation17 + $0x18] sm:$0xf]
    %v1416 = vld [vmem:[#allocation17 + $0x1c] sm:$0xf]
    %v1417 = vld [vmem:[#allocation17 + $0x20] sm:$0xf]
    %v1418 = vld [vmem:[#allocation17 + $0x24] sm:$0xf]
    %v1419 = vld [vmem:[#allocation17 + $0x28] sm:$0xf]
    %v1420 = vld [vmem:[#allocation17 + $0x2c] sm:$0xf]
    %v1421 = vld [vmem:[#allocation17 + $0x30] sm:$0xf]
    %v1422 = vld [vmem:[#allocation17 + $0x34] sm:$0xf]
    %v1423 = vld [vmem:[#allocation17 + $0x38] sm:$0xf]
    %v1424 = vld [vmem:[#allocation17 + $0x3c] sm:$0xf]
    %v1441 = vunpack.c.l.b16 %v1409
    %v1442 = vunpack.c.l.b16 %v1410
    %v1443 = vunpack.c.l.b16 %v1411
    %v1444 = vunpack.c.l.b16 %v1412
    %v1445 = vunpack.c.l.b16 %v1413
    %v1446 = vunpack.c.l.b16 %v1414
    %v1447 = vunpack.c.l.b16 %v1415
    %v1448 = vunpack.c.l.b16 %v1416
    %v1449 = vunpack.c.l.b16 %v1417
    %v1450 = vunpack.c.l.b16 %v1418
    %v1451 = vunpack.c.l.b16 %v1419
    %v1452 = vunpack.c.l.b16 %v1420
    %v1453 = vunpack.c.l.b16 %v1421
    %v1454 = vunpack.c.l.b16 %v1422
    %v1455 = vunpack.c.l.b16 %v1423
    %v1456 = vunpack.c.l.b16 %v1424
    %v1457 = vpack.c.b16 %v1442, %v1441
    %v1458 = vpack.c.b16 %v1444, %v1443
    %v1459 = vpack.c.b16 %v1446, %v1445
    %v1460 = vpack.c.b16 %v1448, %v1447
    %v1461 = vpack.c.b16 %v1450, %v1449
    %v1462 = vpack.c.b16 %v1452, %v1451
    %v1463 = vpack.c.b16 %v1454, %v1453
    %v1464 = vpack.c.b16 %v1456, %v1455
    %1473 = vmatprep.subr.bf16.mxu0 0
    %1474 = vmatpush1.bf16.msra.mxu0 %v1240
    %1475 = vmatprep.subr.bf16.mxu0 0
    %1476 = vmatpush1.bf16.msra.mxu0 %v1241
    %1477 = vmatprep.subr.bf16.mxu0 0
    %1478 = vmatpush1.bf16.msra.mxu0 %v1242
    %1479 = vmatprep.subr.bf16.mxu0 0
    %1480 = vmatpush1.bf16.msra.mxu0 %v1243
    %1481 = vmatprep.subr.bf16.mxu0 0
    %1482 = vmatpush1.bf16.msra.mxu0 %v1244
    %1483 = vmatprep.subr.bf16.mxu0 0
    %1484 = vmatpush1.bf16.msra.mxu0 %v1245
    %1485 = vmatprep.subr.bf16.mxu0 0
    %1486 = vmatpush1.bf16.msra.mxu0 %v1246
    %1487 = vmatprep.subr.bf16.mxu0 0
    %1488 = vmatpush1.bf16.msra.mxu0 %v1247
    %1489 = vmatprep.subr.bf16.mxu0 0
    %1490 = vmatpush1.bf16.msra.mxu0 0
    %1491 = vmatprep.subr.bf16.mxu0 0
    %1492 = vmatpush1.bf16.msra.mxu0 0
    %1493 = vmatprep.subr.bf16.mxu0 0
    %1494 = vmatpush1.bf16.msra.mxu0 0
    %1495 = vmatprep.subr.bf16.mxu0 0
    %1496 = vmatpush1.bf16.msra.mxu0 0
    %1497 = vmatprep.subr.bf16.mxu0 0
    %1498 = vmatpush1.bf16.msra.mxu0 0
    %1499 = vmatprep.subr.bf16.mxu0 0
    %1500 = vmatpush1.bf16.msra.mxu0 0
    %1501 = vmatprep.subr.bf16.mxu0 0
    %1502 = vmatpush1.bf16.msra.mxu0 0
    %1503 = vmatprep.subr.bf16.mxu0 0
    %1504 = vmatpush1.bf16.msra.mxu0 0
    %1505 = vmatprep.mubr.bf16.mxu0 0
    %1506 = vmatmul.mubr.bf16.gmra.mrb[0].mxu0 %v1457
    %v1507 = vpop.f32.mrb[0].mxu0
    %v1508 = vadd.f32 0.0, %v1507
    %v1509 = vpop.f32.mrb[0].mxu0
    %v1510 = vpop.f32.mrb[0].mxu0
    %v1511 = vadd.f32 0.0, %v1510
    %v1512 = vpop.f32.mrb[0].mxu0
    %1513 = vmatprep.mubr.bf16.mxu0 0
    %1514 = vmatmul.mubr.bf16.gmra.mrb[0].mxu0 %v1458
    %v1515 = vpop.f32.mrb[0].mxu0
    %v1516 = vadd.f32 0.0, %v1515
    %v1517 = vpop.f32.mrb[0].mxu0
    %v1518 = vpop.f32.mrb[0].mxu0
    %v1519 = vadd.f32 0.0, %v1518
    %v1520 = vpop.f32.mrb[0].mxu0
    %1521 = vmatprep.mubr.bf16.mxu0 0
    %1522 = vmatmul.mubr.bf16.gmra.mrb[0].mxu0 %v1459
    %v1523 = vpop.f32.mrb[0].mxu0
    %v1524 = vadd.f32 0.0, %v1523
    %v1525 = vpop.f32.mrb[0].mxu0
    %v1526 = vpop.f32.mrb[0].mxu0
    %v1527 = vadd.f32 0.0, %v1526
    %v1528 = vpop.f32.mrb[0].mxu0
    %1529 = vmatprep.mubr.bf16.mxu0 0
    %1530 = vmatmul.mubr.bf16.gmra.mrb[0].mxu0 %v1460
    %v1531 = vpop.f32.mrb[0].mxu0
    %v1532 = vadd.f32 0.0, %v1531
    %v1533 = vpop.f32.mrb[0].mxu0
    %v1534 = vpop.f32.mrb[0].mxu0
    %v1535 = vadd.f32 0.0, %v1534
    %v1536 = vpop.f32.mrb[0].mxu0
    %1537 = vmatprep.mubr.bf16.mxu0 0
    %1538 = vmatmul.mubr.bf16.gmra.mrb[0].mxu0 %v1461
    %v1539 = vpop.f32.mrb[0].mxu0
    %v1540 = vadd.f32 0.0, %v1539
    %v1541 = vpop.f32.mrb[0].mxu0
    %v1542 = vpop.f32.mrb[0].mxu0
    %v1543 = vadd.f32 0.0, %v1542
    %v1544 = vpop.f32.mrb[0].mxu0
    %1545 = vmatprep.mubr.bf16.mxu0 0
    %1546 = vmatmul.mubr.bf16.gmra.mrb[0].mxu0 %v1462
    %v1547 = vpop.f32.mrb[0].mxu0
    %v1548 = vadd.f32 0.0, %v1547
    %v1549 = vpop.f32.mrb[0].mxu0
    %v1550 = vpop.f32.mrb[0].mxu0
    %v1551 = vadd.f32 0.0, %v1550
    %v1552 = vpop.f32.mrb[0].mxu0
    %1553 = vmatprep.mubr.bf16.mxu0 0
    %1554 = vmatmul.mubr.bf16.gmra.mrb[0].mxu0 %v1463
    %v1555 = vpop.f32.mrb[0].mxu0
    %v1556 = vadd.f32 0.0, %v1555
    %v1557 = vpop.f32.mrb[0].mxu0
    %v1558 = vpop.f32.mrb[0].mxu0
    %v1559 = vadd.f32 0.0, %v1558
    %v1560 = vpop.f32.mrb[0].mxu0
    %1561 = vmatprep.mubr.bf16.mxu0 0
    %1562 = vmatmul.mubr.bf16.gmra.mrb[0].mxu0 %v1464
    %v1563 = vpop.f32.mrb[0].mxu0
    %v1564 = vadd.f32 0.0, %v1563
    %v1565 = vpop.f32.mrb[0].mxu0
    %v1566 = vpop.f32.mrb[0].mxu0
    %v1567 = vadd.f32 0.0, %v1566
    %v1568 = vpop.f32.mrb[0].mxu0
    %1569 = vdwg.mxu0
    %v1570 = vmul.f32 %v1347, %v1508
    %v1571 = vmul.f32 %v1350, %v1511
    %v1572 = vmul.f32 %v1355, %v1516
    %v1573 = vmul.f32 %v1358, %v1519
    %v1574 = vmul.f32 %v1363, %v1524
    %v1575 = vmul.f32 %v1366, %v1527
    %v1576 = vmul.f32 %v1371, %v1532
    %v1577 = vmul.f32 %v1374, %v1535
    %v1578 = vmul.f32 %v1379, %v1540
    %v1579 = vmul.f32 %v1382, %v1543
    %v1580 = vmul.f32 %v1387, %v1548
    %v1581 = vmul.f32 %v1390, %v1551
    %v1582 = vmul.f32 %v1395, %v1556
    %v1583 = vmul.f32 %v1398, %v1559
    %v1584 = vmul.f32 %v1403, %v1564
    %v1585 = vmul.f32 %v1406, %v1567
    %1586 = vadd.xlane.f32.xlu0 %v1570
    %v1587 = vpop.xlane.xlu0 %1586
    %1588 = vadd.xlane.f32.xlu0 %v1571
    %v1589 = vpop.xlane.xlu0 %1588
    %1590 = vadd.xlane.f32.xlu0 %v1572
    %v1591 = vpop.xlane.xlu0 %1590
    %1592 = vadd.xlane.f32.xlu0 %v1573
    %v1593 = vpop.xlane.xlu0 %1592
    %1594 = vadd.xlane.f32.xlu0 %v1574
    %v1595 = vpop.xlane.xlu0 %1594
    %1596 = vadd.xlane.f32.xlu0 %v1575
    %v1597 = vpop.xlane.xlu0 %1596
    %1598 = vadd.xlane.f32.xlu0 %v1576
    %v1599 = vpop.xlane.xlu0 %1598
    %1600 = vadd.xlane.f32.xlu0 %v1577
    %v1601 = vpop.xlane.xlu0 %1600
    %1602 = vadd.xlane.f32.xlu0 %v1578
    %v1603 = vpop.xlane.xlu0 %1602
    %1604 = vadd.xlane.f32.xlu0 %v1579
    %v1605 = vpop.xlane.xlu0 %1604
    %1606 = vadd.xlane.f32.xlu0 %v1580
    %v1607 = vpop.xlane.xlu0 %1606
    %1608 = vadd.xlane.f32.xlu0 %v1581
    %v1609 = vpop.xlane.xlu0 %1608
    %1610 = vadd.xlane.f32.xlu0 %v1582
    %v1611 = vpop.xlane.xlu0 %1610
    %1612 = vadd.xlane.f32.xlu0 %v1583
    %v1613 = vpop.xlane.xlu0 %1612
    %1614 = vadd.xlane.f32.xlu0 %v1584
    %v1615 = vpop.xlane.xlu0 %1614
    %1616 = vadd.xlane.f32.xlu0 %v1585
    %v1617 = vpop.xlane.xlu0 %1616
    %vm1618 = vcmask 7168
    %1619 = vst.msk [vmem:[#allocation20] sm:$0xff] %vm1618, %v1587
    %1620 = vst.msk [vmem:[#allocation20 + $0x8] sm:$0xff] %vm1618, %v1589
    %1621 = vst.msk [vmem:[#allocation20 + $0x10] sm:$0xff] %vm1618, %v1591
    %1622 = vst.msk [vmem:[#allocation20 + $0x18] sm:$0xff] %vm1618, %v1593
    %1623 = vst.msk [vmem:[#allocation20 + $0x20] sm:$0xff] %vm1618, %v1595
    %1624 = vst.msk [vmem:[#allocation20 + $0x28] sm:$0xff] %vm1618, %v1597
    %1625 = vst.msk [vmem:[#allocation20 + $0x30] sm:$0xff] %vm1618, %v1599
    %1626 = vst.msk [vmem:[#allocation20 + $0x38] sm:$0xff] %vm1618, %v1601
    %1627 = vst.msk [vmem:[#allocation20 + $0x40] sm:$0xff] %vm1618, %v1603
    %1628 = vst.msk [vmem:[#allocation20 + $0x48] sm:$0xff] %vm1618, %v1605
    %1629 = vst.msk [vmem:[#allocation20 + $0x50] sm:$0xff] %vm1618, %v1607
    %1630 = vst.msk [vmem:[#allocation20 + $0x58] sm:$0xff] %vm1618, %v1609
    %1631 = vst.msk [vmem:[#allocation20 + $0x60] sm:$0xff] %vm1618, %v1611
    %1632 = vst.msk [vmem:[#allocation20 + $0x68] sm:$0xff] %vm1618, %v1613
    %1633 = vst.msk [vmem:[#allocation20 + $0x70] sm:$0xff] %vm1618, %v1615
    %1634 = vst.msk [vmem:[#allocation20 + $0x78] sm:$0xff] %vm1618, %v1617
    // Predicated region
    $region82: #{movie_user_forward.1} parent=1 // pred_check
      _
    $region83: #{movie_user_forward.1} parent=1 // pred_check_branch
      %1636 = sbr.rel (0) target = $region85
    $region84: #{movie_user_forward.1} parent=1 // pred_region
      %s1638 = ssub.s32 2048, 2048
      %1639 = vsyncadd [#allocation4], %s1638
      %s1640 = sshll.u32 [#allocation19], 4
      %s1641 = int_to_ptr.vmem [resolvable:$true] %s1640
      %1646 = dma.vmem_to_hbm [thread:$0]  %s1641, 2048, %s10, [#allocation4], 128, 128, 8
    $region85: #{movie_user_forward.1} parent=1 // pred_fallthru
      _
    // Predicated region
    $region86: #{movie_user_forward.1} parent=1 // pred_check
      _
    $region87: #{movie_user_forward.1} parent=1 // pred_check_branch
      %1648 = sbr.rel (0) target = $region89
    $region88: #{movie_user_forward.1} parent=1 // pred_region
      %s1650 = ssub.s32 2048, 2048
      %1651 = vsyncadd [#allocation21], %s1650
      %s1652 = sshll.u32 [#allocation20], 4
      %s1653 = int_to_ptr.vmem [resolvable:$true] %s1652
      %1658 = dma.vmem_to_hbm [thread:$0]  %s1653, 2048, %s11, [#allocation21], 128, 128, 8
    $region89: #{movie_user_forward.1} parent=1 // pred_fallthru
      _
    // Predicated region
    $region90: #{movie_user_forward.1} parent=1 // pred_check
      _
    $region91: #{movie_user_forward.1} parent=1 // pred_check_branch
      %1660 = sbr.rel (0) target = $region93
    $region92: #{movie_user_forward.1} parent=1 // pred_region
      %1661 = dma.done [#allocation4], 2048
    $region93: #{movie_user_forward.1} parent=1 // pred_fallthru
      _
    // Predicated region
    $region94: #{movie_user_forward.1} parent=1 // pred_check
      _
    $region95: #{movie_user_forward.1} parent=1 // pred_check_branch
      %1663 = sbr.rel (0) target = $region97
    $region96: #{movie_user_forward.1} parent=1 // pred_region
      %1664 = dma.done [#allocation21], 2048
    $region97: #{movie_user_forward.1} parent=1 // pred_fallthru
      _
    %1665 = vsyncpa [#allocation3], 1
    %1666 = vsyncpa [#allocation6], 1
    %1667 = vsyncpa [#allocation9], 1
    %1668 = vsyncpa [#allocation12], 1
    %1669 = vsyncpa [#allocation15], 1
    %1670 = vsyncpa [#allocation18], 1
    %1671 = vsyncpa [#allocation4], 1
    %1672 = vsyncpa [#allocation21], 1

</llo_original>
